<compile_context>
chip_gen: v6e
topology: v6e:2x2x1
jax: 0.10.0
libtpu: 0.0.40
codegen_flags: <defaults>
</compile_context>

<pallas_src>
import functools
import math

import jax
import jax.numpy as jnp
from jax.experimental import pallas as pl
from jax.experimental.pallas import tpu as pltpu


# ----------------------------------------------------------------------------
# Fused MHA kernel: one (batch, query-tile) block per grid step.
# ----------------------------------------------------------------------------
def _mha_kernel(q_ref, k_ref, v_ref, mask_ref,
                wq_ref, bq_ref, wk_ref, bk_ref, wv_ref, bv_ref, wo_ref, bo_ref,
                out_ref, ctx_ref, *, num_heads, d_key, d_value):
    f32 = jnp.float32
    bf16 = jnp.bfloat16

    tq = q_ref.shape[1]         # query rows in this tile
    sk = k_ref.shape[1]         # full key/value length
    hidden = q_ref.shape[2]

    # ---- QKV projections, head-batched (weights pre-split to (nh, H, d)) ----
    xq = jnp.broadcast_to(q_ref[0].astype(bf16), (num_heads, tq, hidden))
    xk = jnp.broadcast_to(k_ref[0].astype(bf16), (num_heads, sk, hidden))
    xv = jnp.broadcast_to(v_ref[0].astype(bf16), (num_heads, sk, hidden))

    q3 = jnp.einsum('hqc,hcd->hqd', xq, wq_ref[...],
                    preferred_element_type=f32) + bq_ref[...]        # (nh, tq, dk)
    k3 = jnp.einsum('hkc,hcd->hkd', xk, wk_ref[...],
                    preferred_element_type=f32) + bk_ref[...]        # (nh, sk, dk)
    v3 = jnp.einsum('hkc,hcd->hkd', xv, wv_ref[...],
                    preferred_element_type=f32) + bv_ref[...]        # (nh, sk, dv)

    # ---- scaled dot-product attention, all heads in one batched dot ----
    # additive mask bias computed once (not per head); mask == 0 -> -1e9
    bias = jnp.where(mask_ref[0] == 0, -1e9, 0.0).astype(f32)        # (tq, sk)
    scale = 1.0 / math.sqrt(d_key)

    s = jnp.einsum('hqd,hkd->hqk', q3.astype(bf16), k3.astype(bf16),
                   preferred_element_type=f32)                        # (nh, tq, sk)
    s = s * scale + bias[None, :, :]

    m = jnp.max(s, axis=-1, keepdims=True)
    p = jnp.exp(s - m)
    denom = jnp.sum(p, axis=-1, keepdims=True)
    p = p * pl.reciprocal(denom, approx=True)
    # TODO(synk): attention dropout is eval-mode (identity); no RNG applied.

    ctx = jnp.einsum('hqk,hkd->hqd', p.astype(bf16), v3.astype(bf16),
                     preferred_element_type=f32)                      # (nh, tq, dv)

    # ---- output projection: out = sum_h ctx[h] @ wo[h] + bo ----
    out_h = jnp.einsum('hqd,hdo->hqo', ctx.astype(bf16), wo_ref[...],
                       preferred_element_type=f32)                    # (nh, tq, H)
    out = jnp.sum(out_h, axis=0) + bo_ref[...]                        # (tq, H)

    out_ref[0] = out.astype(out_ref.dtype)
    ctx_ref[0] = ctx.astype(ctx_ref.dtype)


def _pick_q_tile(sq):
    for cand in (512, 256, 128, 64, 32, 16, 8):
        if sq % cand == 0:
            return cand
    return sq


def multi_head_attention(queries, keys, values, mask, params, *,
                         num_heads, d_key, d_value):
    """Returns (output, per_head_context) matching the torch module's forward."""
    B, Sq, H = queries.shape
    Sk = keys.shape[1]
    assert values.shape[1] == Sk
    # torch's out_transfer consumes num_heads*d_key features built from the
    # per-head (d_value-wide) context, so the module implicitly needs d_key==d_value.
    assert d_key == d_value, "out_transfer expects num_heads*d_key context features"

    bf16 = jnp.bfloat16
    f32 = jnp.float32
    # Pre-split weights per head (trace-time, free) and pre-cast MXU operands
    # to bf16; biases stay f32 (elementwise / accumulation stays f32 in-kernel).
    wq_h = params["wq"].reshape(H, num_heads, d_key).transpose(1, 0, 2).astype(bf16)
    wk_h = params["wk"].reshape(H, num_heads, d_key).transpose(1, 0, 2).astype(bf16)
    wv_h = params["wv"].reshape(H, num_heads, d_value).transpose(1, 0, 2).astype(bf16)
    wo_h = params["wo"].reshape(num_heads, d_value, H).astype(bf16)
    bq_h = params["bq"].reshape(num_heads, 1, d_key).astype(f32)
    bk_h = params["bk"].reshape(num_heads, 1, d_key).astype(f32)
    bv_h = params["bv"].reshape(num_heads, 1, d_value).astype(f32)
    bo = params["bo"].astype(f32)

    TQ = _pick_q_tile(Sq)
    grid = (B, Sq // TQ)

    def const3(shape):
        return pl.BlockSpec(shape, lambda b, i: (0, 0, 0))

    kernel = functools.partial(_mha_kernel, num_heads=num_heads,
                               d_key=d_key, d_value=d_value)

    out, ctx = pl.pallas_call(
        kernel,
        out_shape=(
            jax.ShapeDtypeStruct((B, Sq, H), queries.dtype),
            jax.ShapeDtypeStruct((B, num_heads, Sq, d_value), queries.dtype),
        ),
        grid=grid,
        in_specs=[
            pl.BlockSpec((1, TQ, H), lambda b, i: (b, i, 0)),        # queries
            pl.BlockSpec((1, Sk, H), lambda b, i: (b, 0, 0)),        # keys
            pl.BlockSpec((1, Sk, H), lambda b, i: (b, 0, 0)),        # values
            pl.BlockSpec((1, TQ, Sk), lambda b, i: (b, i, 0)),       # mask
            const3((num_heads, H, d_key)),                           # wq (resident)
            const3((num_heads, 1, d_key)),                           # bq
            const3((num_heads, H, d_key)),                           # wk
            const3((num_heads, 1, d_key)),                           # bk
            const3((num_heads, H, d_value)),                         # wv
            const3((num_heads, 1, d_value)),                         # bv
            const3((num_heads, d_value, H)),                         # wo
            pl.BlockSpec((1, H), lambda b, i: (0, 0)),               # bo
        ],
        out_specs=(
            pl.BlockSpec((1, TQ, H), lambda b, i: (b, i, 0)),
            pl.BlockSpec((1, num_heads, TQ, d_value), lambda b, i: (b, 0, i, 0)),
        ),
        compiler_params=pltpu.CompilerParams(
            dimension_semantics=("parallel", "parallel"),
            vmem_limit_bytes=48 * 1024 * 1024,   # headroom under v7x's 64 MiB VMEM
        ),
    )(queries, keys, values, mask,
      wq_h, bq_h, wk_h, bk_h, wv_h, bv_h, wo_h, bo)

    # per-head context in torch layout (B, Sq, num_heads, d_key)
    return out, ctx.transpose(0, 2, 1, 3)


# ----------------------------------------------------------------------------
# Deterministic parameter init (torch.nn.Linear-style uniform), weights (in,out)
# ----------------------------------------------------------------------------
def _init_linear(key, fan_in, fan_out):
    k1, k2 = jax.random.split(key)
    bound = 1.0 / math.sqrt(fan_in)
    w = jax.random.uniform(k1, (fan_in, fan_out), jnp.float32, -bound, bound)
    b = jax.random.uniform(k2, (1, fan_out), jnp.float32, -bound, bound)
    return w, b


def init_mha_params(key, hidden, num_heads, d_key, d_value):
    ks = jax.random.split(key, 4)
    wq, bq = _init_linear(ks[0], hidden, num_heads * d_key)
    wk, bk = _init_linear(ks[1], hidden, num_heads * d_key)
    wv, bv = _init_linear(ks[2], hidden, num_heads * d_value)
    wo, bo = _init_linear(ks[3], num_heads * d_key, hidden)
    return dict(wq=wq, bq=bq, wk=wk, bk=bk, wv=wv, bv=bv, wo=wo, bo=bo)


# ----------------------------------------------------------------------------
# Pure-JAX (f32) reference of the torch forward, for a correctness check
# ----------------------------------------------------------------------------
def mha_reference(queries, keys, values, mask, p, *, num_heads, d_key, d_value):
    B, Sq, H = queries.shape
    q = queries @ p["wq"] + p["bq"]
    k = keys @ p["wk"] + p["bk"]
    v = values @ p["wv"] + p["bv"]
    q = q.reshape(B, Sq, num_heads, d_key).transpose(0, 2, 1, 3)
    k = k.reshape(B, -1, num_heads, d_key).transpose(0, 2, 1, 3)
    v = v.reshape(B, -1, num_heads, d_value).transpose(0, 2, 1, 3)
    s = jnp.einsum('bhqd,bhkd->bhqk', q, k) / math.sqrt(d_key)
    s = jnp.where(mask[:, None, :, :] == 0, -1e9, s)
    w = jax.nn.softmax(s, axis=-1)
    ctx = jnp.einsum('bhqk,bhkd->bhqd', w, v)          # (B, nh, Sq, dv)
    ctx_t = ctx.transpose(0, 2, 1, 3)                  # (B, Sq, nh, dv)
    out = ctx_t.reshape(B, Sq, num_heads * d_value) @ p["wo"] + p["bo"]
    return out, ctx_t


# ----------------------------------------------------------------------------
if __name__ == "__main__":
    B, SQ, SK = 2, 8, 8
    H = 32
    NUM_HEADS, D_KEY, D_VALUE = 2, 16, 16
    # attention_dropout = 0.1 in the module; eval mode -> identity.

    key = jax.random.PRNGKey(0)
    key, kq, kkv, kp = jax.random.split(key, 4)
    queries = jax.random.normal(kq, (B, SQ, H), jnp.float32)
    keys_vals = jax.random.normal(kkv, (B, SK, H), jnp.float32)

    # causal mask (mask == 0 -> masked out), broadcast over batch
    causal = jnp.tril(jnp.ones((SQ, SK), jnp.int32))
    mask = jnp.broadcast_to(causal, (B, SQ, SK))

    params = init_mha_params(kp, H, NUM_HEADS, D_KEY, D_VALUE)

    out, ctx = multi_head_attention(queries, keys_vals, keys_vals, mask, params,
                                    num_heads=NUM_HEADS, d_key=D_KEY,
                                    d_value=D_VALUE)
    jax.block_until_ready(out)
    jax.block_until_ready(ctx)

    assert out.shape == (B, SQ, H)
    assert ctx.shape == (B, SQ, NUM_HEADS, D_KEY)

    # correctness check vs pure-JAX f32 reference (kernel uses bf16 MXU operands)
    out_ref, ctx_ref = mha_reference(queries, keys_vals, keys_vals, mask, params,
                                     num_heads=NUM_HEADS, d_key=D_KEY,
                                     d_value=D_VALUE)
    assert float(jnp.max(jnp.abs(out - out_ref))) < 0.1
    assert float(jnp.max(jnp.abs(ctx - ctx_ref))) < 0.1

    print("KERNEL_OK")
</pallas_src>

<mosaic_0001>
module attributes {stable_mosaic.version = 11 : i64} {
  func.func @_mha_kernel(%arg0: i32, %arg1: i32, %arg2: memref<1x8x32xf32, #tpu.memory_space<vmem>>, %arg3: memref<1x8x32xf32, #tpu.memory_space<vmem>>, %arg4: memref<1x8x32xf32, #tpu.memory_space<vmem>>, %arg5: memref<1x8x8xi32, #tpu.memory_space<vmem>>, %arg6: memref<2x32x16xbf16, #tpu.memory_space<vmem>>, %arg7: memref<2x1x16xf32, #tpu.memory_space<vmem>>, %arg8: memref<2x32x16xbf16, #tpu.memory_space<vmem>>, %arg9: memref<2x1x16xf32, #tpu.memory_space<vmem>>, %arg10: memref<2x32x16xbf16, #tpu.memory_space<vmem>>, %arg11: memref<2x1x16xf32, #tpu.memory_space<vmem>>, %arg12: memref<2x16x32xbf16, #tpu.memory_space<vmem>>, %arg13: memref<1x32xf32, #tpu.memory_space<vmem>>, %arg14: memref<1x8x32xf32, #tpu.memory_space<vmem>>, %arg15: memref<1x2x8x16xf32, #tpu.memory_space<vmem>>) attributes {dimension_semantics = [#tpu.dimension_semantics<parallel>, #tpu.dimension_semantics<parallel>], iteration_bounds = array<i64: 2, 1>, scalar_prefetch = 0 : i64, scratch_operands = 0 : i64, tpu.core_type = #tpu.core_type<tc>, window_params = [{transform_indices = @transform_0, window_bounds = array<i64: 1, 8, 32>}, {transform_indices = @transform_1, window_bounds = array<i64: 1, 8, 32>}, {transform_indices = @transform_2, window_bounds = array<i64: 1, 8, 32>}, {transform_indices = @transform_3, window_bounds = array<i64: 1, 8, 8>}, {pipeline_mode = #tpu.pipeline_mode<synchronous>, transform_indices = @transform_4, window_bounds = array<i64: 2, 32, 16>}, {pipeline_mode = #tpu.pipeline_mode<synchronous>, transform_indices = @transform_5, window_bounds = array<i64: 2, 1, 16>}, {pipeline_mode = #tpu.pipeline_mode<synchronous>, transform_indices = @transform_6, window_bounds = array<i64: 2, 32, 16>}, {pipeline_mode = #tpu.pipeline_mode<synchronous>, transform_indices = @transform_7, window_bounds = array<i64: 2, 1, 16>}, {pipeline_mode = #tpu.pipeline_mode<synchronous>, transform_indices = @transform_8, window_bounds = array<i64: 2, 32, 16>}, {pipeline_mode = #tpu.pipeline_mode<synchronous>, transform_indices = @transform_9, window_bounds = array<i64: 2, 1, 16>}, {pipeline_mode = #tpu.pipeline_mode<synchronous>, transform_indices = @transform_10, window_bounds = array<i64: 2, 16, 32>}, {pipeline_mode = #tpu.pipeline_mode<synchronous>, transform_indices = @transform_11, window_bounds = array<i64: 1, 32>}, {transform_indices = @transform_12, window_bounds = array<i64: 1, 8, 32>}, {transform_indices = @transform_13, window_bounds = array<i64: 1, 2, 8, 16>}]} {
    %c0 = arith.constant 0 : index
    %c0_0 = arith.constant 0 : index
    %c0_1 = arith.constant 0 : index
    %0 = vector.load %arg2[%c0, %c0_0, %c0_1] : memref<1x8x32xf32, #tpu.memory_space<vmem>>, vector<1x8x32xf32>
    %1 = vector.shape_cast %0 : vector<1x8x32xf32> to vector<8x32xf32>
    %2 = arith.truncf %1 : vector<8x32xf32> to vector<8x32xbf16>
    %3 = vector.shape_cast %2 : vector<8x32xbf16> to vector<1x8x32xbf16>
    %4 = vector.broadcast %3 : vector<1x8x32xbf16> to vector<2x8x32xbf16>
    %c0_2 = arith.constant 0 : index
    %c0_3 = arith.constant 0 : index
    %c0_4 = arith.constant 0 : index
    %5 = vector.load %arg3[%c0_2, %c0_3, %c0_4] : memref<1x8x32xf32, #tpu.memory_space<vmem>>, vector<1x8x32xf32>
    %6 = vector.shape_cast %5 : vector<1x8x32xf32> to vector<8x32xf32>
    %7 = arith.truncf %6 : vector<8x32xf32> to vector<8x32xbf16>
    %8 = vector.shape_cast %7 : vector<8x32xbf16> to vector<1x8x32xbf16>
    %9 = vector.broadcast %8 : vector<1x8x32xbf16> to vector<2x8x32xbf16>
    %c0_5 = arith.constant 0 : index
    %c0_6 = arith.constant 0 : index
    %c0_7 = arith.constant 0 : index
    %10 = vector.load %arg4[%c0_5, %c0_6, %c0_7] : memref<1x8x32xf32, #tpu.memory_space<vmem>>, vector<1x8x32xf32>
    %11 = vector.shape_cast %10 : vector<1x8x32xf32> to vector<8x32xf32>
    %12 = arith.truncf %11 : vector<8x32xf32> to vector<8x32xbf16>
    %13 = vector.shape_cast %12 : vector<8x32xbf16> to vector<1x8x32xbf16>
    %14 = vector.broadcast %13 : vector<1x8x32xbf16> to vector<2x8x32xbf16>
    %c0_8 = arith.constant 0 : index
    %c0_9 = arith.constant 0 : index
    %c0_10 = arith.constant 0 : index
    %15 = vector.load %arg6[%c0_8, %c0_9, %c0_10] : memref<2x32x16xbf16, #tpu.memory_space<vmem>>, vector<2x32x16xbf16>
    "tpu.trace_start"() <{level = 10 : i32, message = "hqc,hcd->hqd"}> : () -> ()
    %cst = arith.constant dense<0.000000e+00> : vector<2x8x16xf32>
    %16 = tpu.matmul %4, %15, %cst {dimension_numbers = #tpu.dot_dimension_numbers<[2], [1], [1], [2], [0, 0, 0, 1, 1, 2], [0], [0]>} : vector<2x8x32xbf16>, vector<2x32x16xbf16>, vector<2x8x16xf32> -> vector<2x8x16xf32>
    "tpu.trace_stop"() : () -> ()
    %c0_11 = arith.constant 0 : index
    %c0_12 = arith.constant 0 : index
    %c0_13 = arith.constant 0 : index
    %17 = vector.load %arg7[%c0_11, %c0_12, %c0_13] : memref<2x1x16xf32, #tpu.memory_space<vmem>>, vector<2x1x16xf32>
    %18 = vector.broadcast %17 : vector<2x1x16xf32> to vector<2x8x16xf32>
    %19 = arith.addf %16, %18 : vector<2x8x16xf32>
    %c0_14 = arith.constant 0 : index
    %c0_15 = arith.constant 0 : index
    %c0_16 = arith.constant 0 : index
    %20 = vector.load %arg8[%c0_14, %c0_15, %c0_16] : memref<2x32x16xbf16, #tpu.memory_space<vmem>>, vector<2x32x16xbf16>
    "tpu.trace_start"() <{level = 10 : i32, message = "hkc,hcd->hkd"}> : () -> ()
    %cst_17 = arith.constant dense<0.000000e+00> : vector<2x8x16xf32>
    %21 = tpu.matmul %9, %20, %cst_17 {dimension_numbers = #tpu.dot_dimension_numbers<[2], [1], [1], [2], [0, 0, 0, 1, 1, 2], [0], [0]>} : vector<2x8x32xbf16>, vector<2x32x16xbf16>, vector<2x8x16xf32> -> vector<2x8x16xf32>
    "tpu.trace_stop"() : () -> ()
    %c0_18 = arith.constant 0 : index
    %c0_19 = arith.constant 0 : index
    %c0_20 = arith.constant 0 : index
    %22 = vector.load %arg9[%c0_18, %c0_19, %c0_20] : memref<2x1x16xf32, #tpu.memory_space<vmem>>, vector<2x1x16xf32>
    %23 = vector.broadcast %22 : vector<2x1x16xf32> to vector<2x8x16xf32>
    %24 = arith.addf %21, %23 : vector<2x8x16xf32>
    %c0_21 = arith.constant 0 : index
    %c0_22 = arith.constant 0 : index
    %c0_23 = arith.constant 0 : index
    %25 = vector.load %arg10[%c0_21, %c0_22, %c0_23] : memref<2x32x16xbf16, #tpu.memory_space<vmem>>, vector<2x32x16xbf16>
    "tpu.trace_start"() <{level = 10 : i32, message = "hkc,hcd->hkd"}> : () -> ()
    %cst_24 = arith.constant dense<0.000000e+00> : vector<2x8x16xf32>
    %26 = tpu.matmul %14, %25, %cst_24 {dimension_numbers = #tpu.dot_dimension_numbers<[2], [1], [1], [2], [0, 0, 0, 1, 1, 2], [0], [0]>} : vector<2x8x32xbf16>, vector<2x32x16xbf16>, vector<2x8x16xf32> -> vector<2x8x16xf32>
    "tpu.trace_stop"() : () -> ()
    %c0_25 = arith.constant 0 : index
    %c0_26 = arith.constant 0 : index
    %c0_27 = arith.constant 0 : index
    %27 = vector.load %arg11[%c0_25, %c0_26, %c0_27] : memref<2x1x16xf32, #tpu.memory_space<vmem>>, vector<2x1x16xf32>
    %28 = vector.broadcast %27 : vector<2x1x16xf32> to vector<2x8x16xf32>
    %29 = arith.addf %26, %28 : vector<2x8x16xf32>
    %c0_28 = arith.constant 0 : index
    %c0_29 = arith.constant 0 : index
    %c0_30 = arith.constant 0 : index
    %30 = vector.load %arg5[%c0_28, %c0_29, %c0_30] : memref<1x8x8xi32, #tpu.memory_space<vmem>>, vector<1x8x8xi32>
    %31 = vector.shape_cast %30 : vector<1x8x8xi32> to vector<8x8xi32>
    %c0_i32 = arith.constant 0 : i32
    %32 = vector.broadcast %c0_i32 : i32 to vector<8x8xi32>
    %33 = arith.cmpi eq, %31, %32 : vector<8x8xi32>
    %cst_31 = arith.constant -1.000000e+09 : f32
    %cst_32 = arith.constant 0.000000e+00 : f32
    %34 = vector.broadcast %cst_31 : f32 to vector<8x8xf32>
    %35 = vector.broadcast %cst_32 : f32 to vector<8x8xf32>
    %36 = arith.select %33, %34, %35 : vector<8x8xi1>, vector<8x8xf32>
    %37 = arith.truncf %19 : vector<2x8x16xf32> to vector<2x8x16xbf16>
    %38 = arith.truncf %24 : vector<2x8x16xf32> to vector<2x8x16xbf16>
    "tpu.trace_start"() <{level = 10 : i32, message = "hqd,hkd->hqk"}> : () -> ()
    %cst_33 = arith.constant dense<0.000000e+00> : vector<2x8x8xf32>
    %39 = tpu.matmul %37, %38, %cst_33 {dimension_numbers = #tpu.dot_dimension_numbers<[2], [2], [1], [1], [0, 0, 0, 1, 1, 1], [0], [0]>} : vector<2x8x16xbf16>, vector<2x8x16xbf16>, vector<2x8x8xf32> -> vector<2x8x8xf32>
    "tpu.trace_stop"() : () -> ()
    %cst_34 = arith.constant 2.500000e-01 : f32
    %40 = vector.broadcast %cst_34 : f32 to vector<2x8x8xf32>
    %41 = arith.mulf %39, %40 : vector<2x8x8xf32>
    %42 = vector.shape_cast %36 : vector<8x8xf32> to vector<1x8x8xf32>
    %43 = vector.broadcast %42 : vector<1x8x8xf32> to vector<2x8x8xf32>
    %44 = arith.addf %41, %43 : vector<2x8x8xf32>
    %cst_35 = arith.constant dense<0xFF800000> : vector<2x8xf32>
    %45 = vector.multi_reduction <maximumf>, %44, %cst_35 [2] : vector<2x8x8xf32> to vector<2x8xf32>
    %46 = vector.shape_cast %45 : vector<2x8xf32> to vector<2x8x1xf32>
    %47 = vector.broadcast %46 : vector<2x8x1xf32> to vector<2x8x8xf32>
    %48 = arith.subf %44, %47 : vector<2x8x8xf32>
    %49 = math.exp %48 : vector<2x8x8xf32>
    %cst_36 = arith.constant dense<0.000000e+00> : vector<2x8xf32>
    %50 = vector.multi_reduction <add>, %49, %cst_36 [2] : vector<2x8x8xf32> to vector<2x8xf32>
    %51 = vector.shape_cast %50 : vector<2x8xf32> to vector<2x8x1xf32>
    %52 = tpu.reciprocal %51 {approx = true} : vector<2x8x1xf32> -> vector<2x8x1xf32>
    %53 = vector.broadcast %52 : vector<2x8x1xf32> to vector<2x8x8xf32>
    %54 = arith.mulf %49, %53 : vector<2x8x8xf32>
    %55 = arith.truncf %54 : vector<2x8x8xf32> to vector<2x8x8xbf16>
    %56 = arith.truncf %29 : vector<2x8x16xf32> to vector<2x8x16xbf16>
    "tpu.trace_start"() <{level = 10 : i32, message = "hqk,hkd->hqd"}> : () -> ()
    %cst_37 = arith.constant dense<0.000000e+00> : vector<2x8x16xf32>
    %57 = tpu.matmul %55, %56, %cst_37 {dimension_numbers = #tpu.dot_dimension_numbers<[2], [1], [1], [2], [0, 0, 0, 1, 1, 2], [0], [0]>} : vector<2x8x8xbf16>, vector<2x8x16xbf16>, vector<2x8x16xf32> -> vector<2x8x16xf32>
    "tpu.trace_stop"() : () -> ()
    %58 = arith.truncf %57 : vector<2x8x16xf32> to vector<2x8x16xbf16>
    %c0_38 = arith.constant 0 : index
    %c0_39 = arith.constant 0 : index
    %c0_40 = arith.constant 0 : index
    %59 = vector.load %arg12[%c0_38, %c0_39, %c0_40] : memref<2x16x32xbf16, #tpu.memory_space<vmem>>, vector<2x16x32xbf16>
    "tpu.trace_start"() <{level = 10 : i32, message = "hqd,hdo->hqo"}> : () -> ()
    %cst_41 = arith.constant dense<0.000000e+00> : vector<2x8x32xf32>
    %60 = tpu.matmul %58, %59, %cst_41 {dimension_numbers = #tpu.dot_dimension_numbers<[2], [1], [1], [2], [0, 0, 0, 1, 1, 2], [0], [0]>} : vector<2x8x16xbf16>, vector<2x16x32xbf16>, vector<2x8x32xf32> -> vector<2x8x32xf32>
    "tpu.trace_stop"() : () -> ()
    %cst_42 = arith.constant dense<0.000000e+00> : vector<8x32xf32>
    %61 = vector.multi_reduction <add>, %60, %cst_42 [0] : vector<2x8x32xf32> to vector<8x32xf32>
    %c0_43 = arith.constant 0 : index
    %c0_44 = arith.constant 0 : index
    %62 = vector.load %arg13[%c0_43, %c0_44] : memref<1x32xf32, #tpu.memory_space<vmem>>, vector<1x32xf32>
    %63 = vector.broadcast %62 : vector<1x32xf32> to vector<8x32xf32>
    %64 = arith.addf %61, %63 : vector<8x32xf32>
    %c0_45 = arith.constant 0 : index
    %c0_46 = arith.constant 0 : index
    %c0_47 = arith.constant 0 : index
    %65 = vector.load %arg14[%c0_45, %c0_46, %c0_47] : memref<1x8x32xf32, #tpu.memory_space<vmem>>, vector<1x8x32xf32>
    %66 = vector.shape_cast %65 : vector<1x8x32xf32> to vector<8x32xf32>
    %67 = vector.shape_cast %64 : vector<8x32xf32> to vector<1x8x32xf32>
    tpu.vector_store %arg14[%c0_45, %c0_46, %c0_47], %67 {strides = array<i32>} : memref<1x8x32xf32, #tpu.memory_space<vmem>>, vector<1x8x32xf32>,
    %c0_48 = arith.constant 0 : index
    %c0_49 = arith.constant 0 : index
    %c0_50 = arith.constant 0 : index
    %c0_51 = arith.constant 0 : index
    %68 = vector.load %arg15[%c0_48, %c0_49, %c0_50, %c0_51] : memref<1x2x8x16xf32, #tpu.memory_space<vmem>>, vector<1x2x8x16xf32>
    %69 = vector.shape_cast %68 : vector<1x2x8x16xf32> to vector<2x8x16xf32>
    %70 = vector.shape_cast %57 : vector<2x8x16xf32> to vector<1x2x8x16xf32>
    tpu.vector_store %arg15[%c0_48, %c0_49, %c0_50, %c0_51], %70 {strides = array<i32>} : memref<1x2x8x16xf32, #tpu.memory_space<vmem>>, vector<1x2x8x16xf32>,
    return
  }
  func.func @transform_0(%arg0: i32, %arg1: i32) -> (i32, i32, i32) {
    %c0_i32 = arith.constant 0 : i32
    %c0_i32_0 = arith.constant 0 : i32
    return %arg0, %arg1, %c0_i32 : i32, i32, i32
  }
  func.func @transform_1(%arg0: i32, %arg1: i32) -> (i32, i32, i32) {
    %c0_i32 = arith.constant 0 : i32
    %c0_i32_0 = arith.constant 0 : i32
    %c0_i32_1 = arith.constant 0 : i32
    return %arg0, %c0_i32, %c0_i32_0 : i32, i32, i32
  }
  func.func @transform_2(%arg0: i32, %arg1: i32) -> (i32, i32, i32) {
    %c0_i32 = arith.constant 0 : i32
    %c0_i32_0 = arith.constant 0 : i32
    %c0_i32_1 = arith.constant 0 : i32
    return %arg0, %c0_i32, %c0_i32_0 : i32, i32, i32
  }
  func.func @transform_3(%arg0: i32, %arg1: i32) -> (i32, i32, i32) {
    %c0_i32 = arith.constant 0 : i32
    %c0_i32_0 = arith.constant 0 : i32
    return %arg0, %arg1, %c0_i32 : i32, i32, i32
  }
  func.func @transform_4(%arg0: i32, %arg1: i32) -> (i32, i32, i32) {
    %c0_i32 = arith.constant 0 : i32
    %c0_i32_0 = arith.constant 0 : i32
    %c0_i32_1 = arith.constant 0 : i32
    %c0_i32_2 = arith.constant 0 : i32
    return %c0_i32, %c0_i32_0, %c0_i32_1 : i32, i32, i32
  }
  func.func @transform_5(%arg0: i32, %arg1: i32) -> (i32, i32, i32) {
    %c0_i32 = arith.constant 0 : i32
    %c0_i32_0 = arith.constant 0 : i32
    %c0_i32_1 = arith.constant 0 : i32
    %c0_i32_2 = arith.constant 0 : i32
    return %c0_i32, %c0_i32_0, %c0_i32_1 : i32, i32, i32
  }
  func.func @transform_6(%arg0: i32, %arg1: i32) -> (i32, i32, i32) {
    %c0_i32 = arith.constant 0 : i32
    %c0_i32_0 = arith.constant 0 : i32
    %c0_i32_1 = arith.constant 0 : i32
    %c0_i32_2 = arith.constant 0 : i32
    return %c0_i32, %c0_i32_0, %c0_i32_1 : i32, i32, i32
  }
  func.func @transform_7(%arg0: i32, %arg1: i32) -> (i32, i32, i32) {
    %c0_i32 = arith.constant 0 : i32
    %c0_i32_0 = arith.constant 0 : i32
    %c0_i32_1 = arith.constant 0 : i32
    %c0_i32_2 = arith.constant 0 : i32
    return %c0_i32, %c0_i32_0, %c0_i32_1 : i32, i32, i32
  }
  func.func @transform_8(%arg0: i32, %arg1: i32) -> (i32, i32, i32) {
    %c0_i32 = arith.constant 0 : i32
    %c0_i32_0 = arith.constant 0 : i32
    %c0_i32_1 = arith.constant 0 : i32
    %c0_i32_2 = arith.constant 0 : i32
    return %c0_i32, %c0_i32_0, %c0_i32_1 : i32, i32, i32
  }
  func.func @transform_9(%arg0: i32, %arg1: i32) -> (i32, i32, i32) {
    %c0_i32 = arith.constant 0 : i32
    %c0_i32_0 = arith.constant 0 : i32
    %c0_i32_1 = arith.constant 0 : i32
    %c0_i32_2 = arith.constant 0 : i32
    return %c0_i32, %c0_i32_0, %c0_i32_1 : i32, i32, i32
  }
  func.func @transform_10(%arg0: i32, %arg1: i32) -> (i32, i32, i32) {
    %c0_i32 = arith.constant 0 : i32
    %c0_i32_0 = arith.constant 0 : i32
    %c0_i32_1 = arith.constant 0 : i32
    %c0_i32_2 = arith.constant 0 : i32
    return %c0_i32, %c0_i32_0, %c0_i32_1 : i32, i32, i32
  }
  func.func @transform_11(%arg0: i32, %arg1: i32) -> (i32, i32) {
    %c0_i32 = arith.constant 0 : i32
    %c0_i32_0 = arith.constant 0 : i32
    %c0_i32_1 = arith.constant 0 : i32
    return %c0_i32, %c0_i32_0 : i32, i32
  }
  func.func @transform_12(%arg0: i32, %arg1: i32) -> (i32, i32, i32) {
    %c0_i32 = arith.constant 0 : i32
    %c0_i32_0 = arith.constant 0 : i32
    return %arg0, %arg1, %c0_i32 : i32, i32, i32
  }
  func.func @transform_13(%arg0: i32, %arg1: i32) -> (i32, i32, i32, i32) {
    %c0_i32 = arith.constant 0 : i32
    %c0_i32_0 = arith.constant 0 : i32
    %c0_i32_1 = arith.constant 0 : i32
    return %arg0, %c0_i32, %arg1, %c0_i32_0 : i32, i32, i32, i32
  }
}

</mosaic_0001>

<llo_original>
// kernel: tpu_custom_call.1
$region0: #{tpu_custom_call.1}
  #allocation0 [shape = 'u32[]', space=smem, size = 0x4, offset = 0x4, fixed_abs, tag = 'smem constant byte address 0x4 - core index']
  #allocation1 [shape = 'u32[144,128]{1,0:T(1,128)}', space=vmem, size = 0x12000, scoped, tag = 'internal scratch']
  %s0 = inlined_call_operand.vmem [shape: f32[2,8,32], index: 0, kind: input, shape index: {}]
  %s1 = inlined_call_operand.vmem [shape: f32[2,8,32], index: 1, kind: input, shape index: {}]
  %s2 = inlined_call_operand.vmem [shape: f32[2,8,32], index: 2, kind: input, shape index: {}]
  %s3 = inlined_call_operand.vmem [shape: s32[2,8,8], index: 3, kind: input, shape index: {}]
  %s4 = inlined_call_operand.vmem [shape: bf16[2,32,16], index: 4, kind: input, shape index: {}]
  %s5 = inlined_call_operand.vmem [shape: f32[2,1,16], index: 5, kind: input, shape index: {}]
  %s6 = inlined_call_operand.vmem [shape: bf16[2,32,16], index: 6, kind: input, shape index: {}]
  %s7 = inlined_call_operand.vmem [shape: f32[2,1,16], index: 7, kind: input, shape index: {}]
  %s8 = inlined_call_operand.vmem [shape: bf16[2,32,16], index: 8, kind: input, shape index: {}]
  %s9 = inlined_call_operand.vmem [shape: f32[2,1,16], index: 9, kind: input, shape index: {}]
  %s10 = inlined_call_operand.vmem [shape: bf16[2,16,32], index: 10, kind: input, shape index: {}]
  %s11 = inlined_call_operand.vmem [shape: f32[1,32], index: 11, kind: input, shape index: {}]
  %s12 = inlined_call_operand.hbm [shape: f32[2,8,32], index: 12, kind: output, shape index: {0}]
  %s13 = inlined_call_operand.hbm [shape: f32[2,2,8,16], index: 13, kind: output, shape index: {1}]
  %14 = xla_tuple %s12, %s13
  %s15 = sld [smem:[#allocation0]]
  $region89: #{tpu_custom_call.1} parent=0
    _
  %s17 = ssub.s32 1, %s15
  %s18 = scalar_select 0, %s17, %s15
  $region1: #{tpu_custom_call.1} parent=0
    #allocation2 [shape = 'u8[8192]{0}', space=vmem, size = 0x2000, scoped, tag = 'output window, operand 0']
    #allocation3 [shape = 's32[2]{0}', space=sflag, size = 0x8, scoped, tag = 'scoped memory for tpu_custom_call.1']
    #allocation4 [shape = 'u8[16384]{0}', space=vmem, size = 0x4000, scoped, tag = 'output window, operand 1']
    #allocation5 [shape = 's32[2]{0}', space=sflag, size = 0x8, scoped, tag = 'scoped memory for tpu_custom_call.1']
    %19 = vsyncpa [#allocation3], 0
    %s20 = scalar_lea.sflag [#allocation3], 1
    %21 = vsyncpa %s20, 0
    %22 = vsyncpa [#allocation5], 0
    %s23 = scalar_lea.sflag [#allocation5], 1
    %24 = vsyncpa %s23, 0
    loop: start=0, step=1, limit=4
    $region2: #{tpu_custom_call.1} parent=1 // loop_pre_header
      _
    $region3: #{tpu_custom_call.1} parent=1 // loop_header
      %s26 = sphi 0, %s30
      %p27 = scmp.ge.s32.totalorder %s26, 4
      %s33 = sphi 0, %s45
      %s34 = sphi 0, %s41
      %s35 = sphi 0, %s33
      %s36 = sphi 0, %s34
      %s37 = sphi 0, %s35
      %s38 = sphi 0, %s36
      %s50 = sphi 0, %s52
      %s53 = sphi 0, %s50
      %s54 = sphi 0, %s53
      %s70 = sphi 0, %s54
      %s76 = sphi 0, %s78
      %s79 = sphi 0, %s76
      %s80 = sphi 0, %s79
      %s96 = sphi 0, %s80
      %s102 = sphi 0, %s104
      %s105 = sphi 0, %s102
      %s106 = sphi 0, %s105
      %s122 = sphi 0, %s106
      %s130 = sphi 0, %s132
      %s133 = sphi 0, %s130
      %s134 = sphi 0, %s133
      %s150 = sphi 0, %s134
      %s154 = sphi 0, %s154
      %s156 = sphi 0, %s154
      %s157 = sphi 0, %s156
      %s171 = sphi 0, %s157
      %s175 = sphi 0, %s175
      %s177 = sphi 0, %s175
      %s178 = sphi 0, %s177
      %s192 = sphi 0, %s178
      %s196 = sphi 0, %s196
      %s198 = sphi 0, %s196
      %s199 = sphi 0, %s198
      %s213 = sphi 0, %s199
      %s217 = sphi 0, %s217
      %s219 = sphi 0, %s217
      %s220 = sphi 0, %s219
      %s234 = sphi 0, %s220
      %s238 = sphi 0, %s238
      %s240 = sphi 0, %s238
      %s241 = sphi 0, %s240
      %s255 = sphi 0, %s241
      %s259 = sphi 0, %s259
      %s261 = sphi 0, %s259
      %s262 = sphi 0, %s261
      %s276 = sphi 0, %s262
      %s280 = sphi 0, %s280
      %s282 = sphi 0, %s280
      %s283 = sphi 0, %s282
      %s297 = sphi 0, %s283
      %s301 = sphi 0, %s301
      %s303 = sphi 0, %s301
      %s304 = sphi 0, %s303
      %s318 = sphi 0, %s304
      %s326 = sphi 0, %s328
      %s329 = sphi 0, %s326
      %s330 = sphi 0, %s329
      %s346 = sphi 0, %s330
      %s354 = sphi 0, %s356
      %s357 = sphi 0, %s354
      %s358 = sphi 0, %s357
      %s374 = sphi 0, %s358
    $region4: #{tpu_custom_call.1} parent=1 // loop_header_branch
      %29 = sbr.rel (%p27) target = $region8
    $region5: #{tpu_custom_call.1} parent=1 // loop_body
      %s31 = ssub.s32 %s26, 1
      %s32 = ssub.s32 %s26, 2
      %s39 = sadd.s32 1, %s34
      %p40 = scmp.ge.s32.totalorder %s39, 1
      %s41 = scalar_select %p40, 0, %s39
      %s42 = sadd.s32 1, %s33
      %s43 = scalar_select %p40, %s42, %s33
      %p44 = scmp.ge.s32.totalorder %s43, 2
      %s45 = scalar_select %p44, 0, %s43
      %s46 = ssub.s32 %s33, %s45
      %s47 = ssub.s32 %s34, %s41
      %s48 = sor.u32 %s46, %s47
      %p49 = scmp.eq.s32.totalorder %s48, 0
      %s51 = sadd.s32 %s50, 1
      %s52 = scalar_select %p49, %s50, %s51
      %p55 = pneg %p49
      %p56 = scmp.eq.s32.totalorder %s26, 1
      %p57 = por %p55, %p56
      %p58 = scmp.ne.s32.totalorder %s50, %s53
      %p59 = scmp.eq.s32.totalorder %s26, 0
      %p60 = por %p58, %p59
      %p61 = scmp.ne.s32.totalorder %s50, %s53
      %p62 = scmp.eq.s32.totalorder %s31, 1
      %p63 = por %p61, %p62
      %p64 = scmp.ne.s32.totalorder %s53, %s54
      %p65 = scmp.eq.s32.totalorder %s31, 0
      %p66 = por %p64, %p65
      %p67 = scmp.ne.s32.totalorder %s53, %s54
      %p68 = scmp.eq.s32.totalorder %s32, 1
      %p69 = por %p67, %p68
      %p71 = scmp.ne.s32.totalorder %s54, %s70
      %p72 = scmp.eq.s32.totalorder %s32, 0
      %p73 = por %p71, %p72
      %s74 = ssub.s32 %s33, %s45
      %p75 = scmp.eq.s32.totalorder %s74, 0
      %s77 = sadd.s32 %s76, 1
      %s78 = scalar_select %p75, %s76, %s77
      %p81 = pneg %p75
      %p82 = scmp.eq.s32.totalorder %s26, 1
      %p83 = por %p81, %p82
      %p84 = scmp.ne.s32.totalorder %s76, %s79
      %p85 = scmp.eq.s32.totalorder %s26, 0
      %p86 = por %p84, %p85
      %p87 = scmp.ne.s32.totalorder %s76, %s79
      %p88 = scmp.eq.s32.totalorder %s31, 1
      %p89 = por %p87, %p88
      %p90 = scmp.ne.s32.totalorder %s79, %s80
      %p91 = scmp.eq.s32.totalorder %s31, 0
      %p92 = por %p90, %p91
      %p93 = scmp.ne.s32.totalorder %s79, %s80
      %p94 = scmp.eq.s32.totalorder %s32, 1
      %p95 = por %p93, %p94
      %p97 = scmp.ne.s32.totalorder %s80, %s96
      %p98 = scmp.eq.s32.totalorder %s32, 0
      %p99 = por %p97, %p98
      %s100 = ssub.s32 %s33, %s45
      %p101 = scmp.eq.s32.totalorder %s100, 0
      %s103 = sadd.s32 %s102, 1
      %s104 = scalar_select %p101, %s102, %s103
      %p107 = pneg %p101
      %p108 = scmp.eq.s32.totalorder %s26, 1
      %p109 = por %p107, %p108
      %p110 = scmp.ne.s32.totalorder %s102, %s105
      %p111 = scmp.eq.s32.totalorder %s26, 0
      %p112 = por %p110, %p111
      %p113 = scmp.ne.s32.totalorder %s102, %s105
      %p114 = scmp.eq.s32.totalorder %s31, 1
      %p115 = por %p113, %p114
      %p116 = scmp.ne.s32.totalorder %s105, %s106
      %p117 = scmp.eq.s32.totalorder %s31, 0
      %p118 = por %p116, %p117
      %p119 = scmp.ne.s32.totalorder %s105, %s106
      %p120 = scmp.eq.s32.totalorder %s32, 1
      %p121 = por %p119, %p120
      %p123 = scmp.ne.s32.totalorder %s106, %s122
      %p124 = scmp.eq.s32.totalorder %s32, 0
      %p125 = por %p123, %p124
      %s126 = ssub.s32 %s33, %s45
      %s127 = ssub.s32 %s34, %s41
      %s128 = sor.u32 %s126, %s127
      %p129 = scmp.eq.s32.totalorder %s128, 0
      %s131 = sadd.s32 %s130, 1
      %s132 = scalar_select %p129, %s130, %s131
      %p135 = pneg %p129
      %p136 = scmp.eq.s32.totalorder %s26, 1
      %p137 = por %p135, %p136
      %p138 = scmp.ne.s32.totalorder %s130, %s133
      %p139 = scmp.eq.s32.totalorder %s26, 0
      %p140 = por %p138, %p139
      %p141 = scmp.ne.s32.totalorder %s130, %s133
      %p142 = scmp.eq.s32.totalorder %s31, 1
      %p143 = por %p141, %p142
      %p144 = scmp.ne.s32.totalorder %s133, %s134
      %p145 = scmp.eq.s32.totalorder %s31, 0
      %p146 = por %p144, %p145
      %p147 = scmp.ne.s32.totalorder %s133, %s134
      %p148 = scmp.eq.s32.totalorder %s32, 1
      %p149 = por %p147, %p148
      %p151 = scmp.ne.s32.totalorder %s134, %s150
      %p152 = scmp.eq.s32.totalorder %s32, 0
      %p153 = por %p151, %p152
      %s155 = sadd.s32 %s154, 1
      %p158 = scmp.eq.s32.totalorder %s26, 1
      %p159 = scmp.ne.s32.totalorder %s154, %s156
      %p160 = scmp.eq.s32.totalorder %s26, 0
      %p161 = por %p159, %p160
      %p162 = scmp.ne.s32.totalorder %s154, %s156
      %p163 = scmp.eq.s32.totalorder %s31, 1
      %p164 = por %p162, %p163
      %p165 = scmp.ne.s32.totalorder %s156, %s157
      %p166 = scmp.eq.s32.totalorder %s31, 0
      %p167 = por %p165, %p166
      %p168 = scmp.ne.s32.totalorder %s156, %s157
      %p169 = scmp.eq.s32.totalorder %s32, 1
      %p170 = por %p168, %p169
      %p172 = scmp.ne.s32.totalorder %s157, %s171
      %p173 = scmp.eq.s32.totalorder %s32, 0
      %p174 = por %p172, %p173
      %s176 = sadd.s32 %s175, 1
      %p179 = scmp.eq.s32.totalorder %s26, 1
      %p180 = scmp.ne.s32.totalorder %s175, %s177
      %p181 = scmp.eq.s32.totalorder %s26, 0
      %p182 = por %p180, %p181
      %p183 = scmp.ne.s32.totalorder %s175, %s177
      %p184 = scmp.eq.s32.totalorder %s31, 1
      %p185 = por %p183, %p184
      %p186 = scmp.ne.s32.totalorder %s177, %s178
      %p187 = scmp.eq.s32.totalorder %s31, 0
      %p188 = por %p186, %p187
      %p189 = scmp.ne.s32.totalorder %s177, %s178
      %p190 = scmp.eq.s32.totalorder %s32, 1
      %p191 = por %p189, %p190
      %p193 = scmp.ne.s32.totalorder %s178, %s192
      %p194 = scmp.eq.s32.totalorder %s32, 0
      %p195 = por %p193, %p194
      %s197 = sadd.s32 %s196, 1
      %p200 = scmp.eq.s32.totalorder %s26, 1
      %p201 = scmp.ne.s32.totalorder %s196, %s198
      %p202 = scmp.eq.s32.totalorder %s26, 0
      %p203 = por %p201, %p202
      %p204 = scmp.ne.s32.totalorder %s196, %s198
      %p205 = scmp.eq.s32.totalorder %s31, 1
      %p206 = por %p204, %p205
      %p207 = scmp.ne.s32.totalorder %s198, %s199
      %p208 = scmp.eq.s32.totalorder %s31, 0
      %p209 = por %p207, %p208
      %p210 = scmp.ne.s32.totalorder %s198, %s199
      %p211 = scmp.eq.s32.totalorder %s32, 1
      %p212 = por %p210, %p211
      %p214 = scmp.ne.s32.totalorder %s199, %s213
      %p215 = scmp.eq.s32.totalorder %s32, 0
      %p216 = por %p214, %p215
      %s218 = sadd.s32 %s217, 1
      %p221 = scmp.eq.s32.totalorder %s26, 1
      %p222 = scmp.ne.s32.totalorder %s217, %s219
      %p223 = scmp.eq.s32.totalorder %s26, 0
      %p224 = por %p222, %p223
      %p225 = scmp.ne.s32.totalorder %s217, %s219
      %p226 = scmp.eq.s32.totalorder %s31, 1
      %p227 = por %p225, %p226
      %p228 = scmp.ne.s32.totalorder %s219, %s220
      %p229 = scmp.eq.s32.totalorder %s31, 0
      %p230 = por %p228, %p229
      %p231 = scmp.ne.s32.totalorder %s219, %s220
      %p232 = scmp.eq.s32.totalorder %s32, 1
      %p233 = por %p231, %p232
      %p235 = scmp.ne.s32.totalorder %s220, %s234
      %p236 = scmp.eq.s32.totalorder %s32, 0
      %p237 = por %p235, %p236
      %s239 = sadd.s32 %s238, 1
      %p242 = scmp.eq.s32.totalorder %s26, 1
      %p243 = scmp.ne.s32.totalorder %s238, %s240
      %p244 = scmp.eq.s32.totalorder %s26, 0
      %p245 = por %p243, %p244
      %p246 = scmp.ne.s32.totalorder %s238, %s240
      %p247 = scmp.eq.s32.totalorder %s31, 1
      %p248 = por %p246, %p247
      %p249 = scmp.ne.s32.totalorder %s240, %s241
      %p250 = scmp.eq.s32.totalorder %s31, 0
      %p251 = por %p249, %p250
      %p252 = scmp.ne.s32.totalorder %s240, %s241
      %p253 = scmp.eq.s32.totalorder %s32, 1
      %p254 = por %p252, %p253
      %p256 = scmp.ne.s32.totalorder %s241, %s255
      %p257 = scmp.eq.s32.totalorder %s32, 0
      %p258 = por %p256, %p257
      %s260 = sadd.s32 %s259, 1
      %p263 = scmp.eq.s32.totalorder %s26, 1
      %p264 = scmp.ne.s32.totalorder %s259, %s261
      %p265 = scmp.eq.s32.totalorder %s26, 0
      %p266 = por %p264, %p265
      %p267 = scmp.ne.s32.totalorder %s259, %s261
      %p268 = scmp.eq.s32.totalorder %s31, 1
      %p269 = por %p267, %p268
      %p270 = scmp.ne.s32.totalorder %s261, %s262
      %p271 = scmp.eq.s32.totalorder %s31, 0
      %p272 = por %p270, %p271
      %p273 = scmp.ne.s32.totalorder %s261, %s262
      %p274 = scmp.eq.s32.totalorder %s32, 1
      %p275 = por %p273, %p274
      %p277 = scmp.ne.s32.totalorder %s262, %s276
      %p278 = scmp.eq.s32.totalorder %s32, 0
      %p279 = por %p277, %p278
      %s281 = sadd.s32 %s280, 1
      %p284 = scmp.eq.s32.totalorder %s26, 1
      %p285 = scmp.ne.s32.totalorder %s280, %s282
      %p286 = scmp.eq.s32.totalorder %s26, 0
      %p287 = por %p285, %p286
      %p288 = scmp.ne.s32.totalorder %s280, %s282
      %p289 = scmp.eq.s32.totalorder %s31, 1
      %p290 = por %p288, %p289
      %p291 = scmp.ne.s32.totalorder %s282, %s283
      %p292 = scmp.eq.s32.totalorder %s31, 0
      %p293 = por %p291, %p292
      %p294 = scmp.ne.s32.totalorder %s282, %s283
      %p295 = scmp.eq.s32.totalorder %s32, 1
      %p296 = por %p294, %p295
      %p298 = scmp.ne.s32.totalorder %s283, %s297
      %p299 = scmp.eq.s32.totalorder %s32, 0
      %p300 = por %p298, %p299
      %s302 = sadd.s32 %s301, 1
      %p305 = scmp.eq.s32.totalorder %s26, 1
      %p306 = scmp.ne.s32.totalorder %s301, %s303
      %p307 = scmp.eq.s32.totalorder %s26, 0
      %p308 = por %p306, %p307
      %p309 = scmp.ne.s32.totalorder %s301, %s303
      %p310 = scmp.eq.s32.totalorder %s31, 1
      %p311 = por %p309, %p310
      %p312 = scmp.ne.s32.totalorder %s303, %s304
      %p313 = scmp.eq.s32.totalorder %s31, 0
      %p314 = por %p312, %p313
      %p315 = scmp.ne.s32.totalorder %s303, %s304
      %p316 = scmp.eq.s32.totalorder %s32, 1
      %p317 = por %p315, %p316
      %p319 = scmp.ne.s32.totalorder %s304, %s318
      %p320 = scmp.eq.s32.totalorder %s32, 0
      %p321 = por %p319, %p320
      %s322 = ssub.s32 %s33, %s45
      %s323 = ssub.s32 %s34, %s41
      %s324 = sor.u32 %s322, %s323
      %p325 = scmp.eq.s32.totalorder %s324, 0
      %s327 = sadd.s32 %s326, 1
      %s328 = scalar_select %p325, %s326, %s327
      %p331 = pneg %p325
      %p332 = scmp.eq.s32.totalorder %s26, 1
      %p333 = por %p331, %p332
      %p334 = scmp.ne.s32.totalorder %s326, %s329
      %p335 = scmp.eq.s32.totalorder %s26, 0
      %p336 = por %p334, %p335
      %p337 = scmp.ne.s32.totalorder %s326, %s329
      %p338 = scmp.eq.s32.totalorder %s31, 1
      %p339 = por %p337, %p338
      %p340 = scmp.ne.s32.totalorder %s329, %s330
      %p341 = scmp.eq.s32.totalorder %s31, 0
      %p342 = por %p340, %p341
      %p343 = scmp.ne.s32.totalorder %s329, %s330
      %p344 = scmp.eq.s32.totalorder %s32, 1
      %p345 = por %p343, %p344
      %p347 = scmp.ne.s32.totalorder %s330, %s346
      %p348 = scmp.eq.s32.totalorder %s32, 0
      %p349 = por %p347, %p348
      %s350 = ssub.s32 %s33, %s45
      %s351 = ssub.s32 %s34, %s41
      %s352 = sor.u32 %s350, %s351
      %p353 = scmp.eq.s32.totalorder %s352, 0
      %s355 = sadd.s32 %s354, 1
      %s356 = scalar_select %p353, %s354, %s355
      %p359 = pneg %p353
      %p360 = scmp.eq.s32.totalorder %s26, 1
      %p361 = por %p359, %p360
      %p362 = scmp.ne.s32.totalorder %s354, %s357
      %p363 = scmp.eq.s32.totalorder %s26, 0
      %p364 = por %p362, %p363
      %p365 = scmp.ne.s32.totalorder %s354, %s357
      %p366 = scmp.eq.s32.totalorder %s31, 1
      %p367 = por %p365, %p366
      %p368 = scmp.ne.s32.totalorder %s357, %s358
      %p369 = scmp.eq.s32.totalorder %s31, 0
      %p370 = por %p368, %p369
      %p371 = scmp.ne.s32.totalorder %s357, %s358
      %p372 = scmp.eq.s32.totalorder %s32, 1
      %p373 = por %p371, %p372
      %p375 = scmp.ne.s32.totalorder %s358, %s374
      %p376 = scmp.eq.s32.totalorder %s32, 0
      %p377 = por %p375, %p376
      %p378 = scmp.le.s32.totalorder 1, %s26
      %p379 = scmp.lt.s32.totalorder %s26, 3
      %p380 = pnand %p378, %p379
      %p381 = pneg %p380
      // Predicated region
      $region9: #{tpu_custom_call.1} parent=5 // pred_check
        _
      $region10: #{tpu_custom_call.1} parent=5 // pred_check_branch
        %383 = sbr.rel (%p380) target = $region12
      $region11: #{tpu_custom_call.1} parent=5 // pred_region
        %s384 = ssub.s32 %s26, 1
        // Predicated region
        $region13: #{tpu_custom_call.1} parent=11 // pred_check
          %p385 = pneg %p167
        $region14: #{tpu_custom_call.1} parent=11 // pred_check_branch
          %387 = sbr.rel (%p385) target = $region16
        $region15: #{tpu_custom_call.1} parent=11 // pred_region
          _
        $region16: #{tpu_custom_call.1} parent=11 // pred_fallthru
          _
        // Predicated region
        $region17: #{tpu_custom_call.1} parent=11 // pred_check
          %p388 = pneg %p188
        $region18: #{tpu_custom_call.1} parent=11 // pred_check_branch
          %390 = sbr.rel (%p388) target = $region20
        $region19: #{tpu_custom_call.1} parent=11 // pred_region
          _
        $region20: #{tpu_custom_call.1} parent=11 // pred_fallthru
          _
        // Predicated region
        $region21: #{tpu_custom_call.1} parent=11 // pred_check
          %p391 = pneg %p209
        $region22: #{tpu_custom_call.1} parent=11 // pred_check_branch
          %393 = sbr.rel (%p391) target = $region24
        $region23: #{tpu_custom_call.1} parent=11 // pred_region
          _
        $region24: #{tpu_custom_call.1} parent=11 // pred_fallthru
          _
        // Predicated region
        $region25: #{tpu_custom_call.1} parent=11 // pred_check
          %p394 = pneg %p230
        $region26: #{tpu_custom_call.1} parent=11 // pred_check_branch
          %396 = sbr.rel (%p394) target = $region28
        $region27: #{tpu_custom_call.1} parent=11 // pred_region
          _
        $region28: #{tpu_custom_call.1} parent=11 // pred_fallthru
          _
        // Predicated region
        $region29: #{tpu_custom_call.1} parent=11 // pred_check
          %p397 = pneg %p251
        $region30: #{tpu_custom_call.1} parent=11 // pred_check_branch
          %399 = sbr.rel (%p397) target = $region32
        $region31: #{tpu_custom_call.1} parent=11 // pred_region
          _
        $region32: #{tpu_custom_call.1} parent=11 // pred_fallthru
          _
        // Predicated region
        $region33: #{tpu_custom_call.1} parent=11 // pred_check
          %p400 = pneg %p272
        $region34: #{tpu_custom_call.1} parent=11 // pred_check_branch
          %402 = sbr.rel (%p400) target = $region36
        $region35: #{tpu_custom_call.1} parent=11 // pred_region
          _
        $region36: #{tpu_custom_call.1} parent=11 // pred_fallthru
          _
        // Predicated region
        $region37: #{tpu_custom_call.1} parent=11 // pred_check
          %p403 = pneg %p293
        $region38: #{tpu_custom_call.1} parent=11 // pred_check_branch
          %405 = sbr.rel (%p403) target = $region40
        $region39: #{tpu_custom_call.1} parent=11 // pred_region
          _
        $region40: #{tpu_custom_call.1} parent=11 // pred_fallthru
          _
        // Predicated region
        $region41: #{tpu_custom_call.1} parent=11 // pred_check
          %p406 = pneg %p314
        $region42: #{tpu_custom_call.1} parent=11 // pred_check_branch
          %408 = sbr.rel (%p406) target = $region44
        $region43: #{tpu_custom_call.1} parent=11 // pred_region
          _
        $region44: #{tpu_custom_call.1} parent=11 // pred_fallthru
          _
      $region12: #{tpu_custom_call.1} parent=5 // pred_fallthru
        _
      %p409 = scmp.lt.s32.totalorder %s26, 2
      // Predicated region
      $region45: #{tpu_custom_call.1} parent=5 // pred_check
        %p410 = pneg %p409
      $region46: #{tpu_custom_call.1} parent=5 // pred_check_branch
        %412 = sbr.rel (%p410) target = $region48
      $region47: #{tpu_custom_call.1} parent=5 // pred_region
        // Predicated region
        $region49: #{tpu_custom_call.1} parent=47 // pred_check
          %p413 = pneg %p60
        $region50: #{tpu_custom_call.1} parent=47 // pred_check_branch
          %415 = sbr.rel (%p413) target = $region52
        $region51: #{tpu_custom_call.1} parent=47 // pred_region
          %p416 = scmp.lt.s32.totalorder %s33, 1
          %s417 = scalar_select %p416, %s33, 1
          %p418 = scmp.lt.s32.totalorder %s34, 0
          %s419 = scalar_select %p418, %s34, 0
          %s420 = sadd.s32 %s419, %s417
          %s421 = smul.addr %s420, 8
          %s422 = scalar_lea.vmem %s0, %s421
        $region52: #{tpu_custom_call.1} parent=47 // pred_fallthru
          _
        // Predicated region
        $region53: #{tpu_custom_call.1} parent=47 // pred_check
          %p423 = pneg %p86
        $region54: #{tpu_custom_call.1} parent=47 // pred_check_branch
          %425 = sbr.rel (%p423) target = $region56
        $region55: #{tpu_custom_call.1} parent=47 // pred_region
          %p426 = scmp.lt.s32.totalorder %s33, 1
          %s427 = scalar_select %p426, %s33, 1
          %s428 = smul.addr %s427, 8
          %s429 = scalar_lea.vmem %s1, %s428
        $region56: #{tpu_custom_call.1} parent=47 // pred_fallthru
          _
        // Predicated region
        $region57: #{tpu_custom_call.1} parent=47 // pred_check
          %p430 = pneg %p112
        $region58: #{tpu_custom_call.1} parent=47 // pred_check_branch
          %432 = sbr.rel (%p430) target = $region60
        $region59: #{tpu_custom_call.1} parent=47 // pred_region
          %p433 = scmp.lt.s32.totalorder %s33, 1
          %s434 = scalar_select %p433, %s33, 1
          %s435 = smul.addr %s434, 8
          %s436 = scalar_lea.vmem %s2, %s435
        $region60: #{tpu_custom_call.1} parent=47 // pred_fallthru
          _
        // Predicated region
        $region61: #{tpu_custom_call.1} parent=47 // pred_check
          %p437 = pneg %p140
        $region62: #{tpu_custom_call.1} parent=47 // pred_check_branch
          %439 = sbr.rel (%p437) target = $region64
        $region63: #{tpu_custom_call.1} parent=47 // pred_region
          %p440 = scmp.lt.s32.totalorder %s33, 1
          %s441 = scalar_select %p440, %s33, 1
          %p442 = scmp.lt.s32.totalorder %s34, 0
          %s443 = scalar_select %p442, %s34, 0
          %s444 = sadd.s32 %s443, %s441
          %s445 = smul.addr %s444, 8
          %s446 = scalar_lea.vmem %s3, %s445
        $region64: #{tpu_custom_call.1} parent=47 // pred_fallthru
          _
      $region48: #{tpu_custom_call.1} parent=5 // pred_fallthru
        _
      %p447 = scmp.le.s32.totalorder 1, %s26
      %p448 = scmp.lt.s32.totalorder %s26, 3
      %p449 = pnand %p447, %p448
      %p450 = pneg %p449
      // Predicated region
      $region65: #{tpu_custom_call.1} parent=5 // pred_check
        _
      $region66: #{tpu_custom_call.1} parent=5 // pred_check_branch
        %452 = sbr.rel (%p449) target = $region68
      $region67: #{tpu_custom_call.1} parent=5 // pred_region
        %s453 = ssub.s32 %s26, 1
        %p454 = scmp.lt.s32.totalorder %s35, 1
        %s455 = scalar_select %p454, %s35, 1
        %p456 = scmp.lt.s32.totalorder %s36, 0
        %s457 = scalar_select %p456, %s36, 0
        %s458 = sadd.s32 %s457, %s455
        %s459 = smul.addr %s458, 8
        %s460 = scalar_lea.vmem %s0, %s459
        %p461 = pneg %p66
        %p462 = pneg %p63
        %p463 = scmp.lt.s32.totalorder %s35, 1
        %s464 = scalar_select %p463, %s35, 1
        %s465 = smul.addr %s464, 8
        %s466 = scalar_lea.vmem %s1, %s465
        %p467 = pneg %p92
        %p468 = pneg %p89
        %p469 = scmp.lt.s32.totalorder %s35, 1
        %s470 = scalar_select %p469, %s35, 1
        %s471 = smul.addr %s470, 8
        %s472 = scalar_lea.vmem %s2, %s471
        %p473 = pneg %p118
        %p474 = pneg %p115
        %p475 = scmp.lt.s32.totalorder %s35, 1
        %s476 = scalar_select %p475, %s35, 1
        %p477 = scmp.lt.s32.totalorder %s36, 0
        %s478 = scalar_select %p477, %s36, 0
        %s479 = sadd.s32 %s478, %s476
        %s480 = smul.addr %s479, 8
        %s481 = scalar_lea.vmem %s3, %s480
        %p482 = pneg %p146
        %p483 = pneg %p143
        %p484 = pneg %p167
        %p485 = pneg %p164
        %p486 = pneg %p188
        %p487 = pneg %p185
        %p488 = pneg %p209
        %p489 = pneg %p206
        %p490 = pneg %p230
        %p491 = pneg %p227
        %p492 = pneg %p251
        %p493 = pneg %p248
        %p494 = pneg %p272
        %p495 = pneg %p269
        %p496 = pneg %p293
        %p497 = pneg %p290
        %p498 = pneg %p314
        %p499 = pneg %p311
        %p500 = pneg %p342
        %p501 = pneg %p339
        %s502 = sand.u32 %s329, 1
        %s503 = scalar_lea.sflag [#allocation3], %s502
        %s504 = sand.u32 %s329, 1
        %s505 = smul.addr %s504, 8
        %s506 = scalar_lea.vmem [#allocation2], %s505
        %p507 = pneg %p370
        %p508 = pneg %p367
        %s509 = sand.u32 %s357, 1
        %s510 = scalar_lea.sflag [#allocation5], %s509
        %s511 = sand.u32 %s357, 1
        %s512 = smul.addr %s511, 16
        %s513 = scalar_lea.vmem [#allocation4], %s512
        %p514 = scmp.lt.s32.totalorder %s35, 1
        %s515 = scalar_select %p514, %s35, 1
        %p516 = scmp.lt.s32.totalorder %s36, 0
        %s517 = scalar_select %p516, %s36, 0
        %s518 = sadd.s32 %s517, %s515
        %s519 = smul.addr %s518, 8
        %s520 = scalar_lea.vmem %s0, %s519
        %p521 = scmp.lt.s32.totalorder %s35, 1
        %s522 = scalar_select %p521, %s35, 1
        %s523 = smul.addr %s522, 8
        %s524 = scalar_lea.vmem %s1, %s523
        %p525 = scmp.lt.s32.totalorder %s35, 1
        %s526 = scalar_select %p525, %s35, 1
        %s527 = smul.addr %s526, 8
        %s528 = scalar_lea.vmem %s2, %s527
        %p529 = scmp.lt.s32.totalorder %s35, 1
        %s530 = scalar_select %p529, %s35, 1
        %p531 = scmp.lt.s32.totalorder %s36, 0
        %s532 = scalar_select %p531, %s36, 0
        %s533 = sadd.s32 %s532, %s530
        %s534 = smul.addr %s533, 8
        %s535 = scalar_lea.vmem %s3, %s534
        %v537 = vld [vmem:[%s520] sm:$0xff]
        %v538 = vpack.c.bf16 %v537, %v537
        %v539 = vld [vmem:[%s524] sm:$0xff]
        %v540 = vpack.c.bf16 %v539, %v539
        %v541 = vld [vmem:[%s528] sm:$0xff]
        %v542 = vpack.c.bf16 %v541, %v541
        %v543 = vld [vmem:[%s4] sm:$0xf]
        %v544 = vld [vmem:[%s4 + $0x4] sm:$0xf]
        %v545 = vld [vmem:[%s4 + $0x8] sm:$0xf]
        %v546 = vld [vmem:[%s4 + $0xc] sm:$0xf]
        %v547 = vld [vmem:[%s4 + $0x10] sm:$0xf]
        %v548 = vld [vmem:[%s4 + $0x14] sm:$0xf]
        %v549 = vld [vmem:[%s4 + $0x18] sm:$0xf]
        %v550 = vld [vmem:[%s4 + $0x1c] sm:$0xf]
        %v551 = vld [vmem:[%s5] sm:$0x1]
        %v552 = vld [vmem:[%s5 + $0x1] sm:$0x1]
        %v555 = vlaneseq
        %v556 = vshrl.u32 %v555, 7
        %v557 = vsub.s32 0, %v556
        %v558 = vrot.slane %v551, %v557
        %v559 = vlaneseq
        %v560 = vshrl.u32 %v559, 7
        %v561 = vsub.s32 0, %v560
        %v562 = vrot.slane %v552, %v561
        %v569 = vunpack.c.l.b16 %v543
        %v570 = vunpack.c.l.b16 %v544
        %v571 = vunpack.c.l.b16 %v545
        %v572 = vunpack.c.l.b16 %v546
        %v573 = vpack.c.b16 %v570, %v569
        %v574 = vpack.c.b16 %v572, %v571
        %vm577 = vcmask 261120
        %v579 = vsel %vm577, %v538, 0
        %581 = vmatprep.subr.bf16.mxu0 0
        %582 = vmatpush1.bf16.msra.mxu0 0
        %583 = vmatprep.subr.bf16.mxu0 0
        %584 = vmatpush1.bf16.msra.mxu0 0
        %585 = vmatprep.subr.bf16.mxu0 0
        %586 = vmatpush1.bf16.msra.mxu0 0
        %587 = vmatprep.subr.bf16.mxu0 0
        %588 = vmatpush1.bf16.msra.mxu0 0
        %589 = vmatprep.subr.bf16.mxu0 0
        %590 = vmatpush1.bf16.msra.mxu0 0
        %591 = vmatprep.subr.bf16.mxu0 0
        %592 = vmatpush1.bf16.msra.mxu0 0
        %593 = vmatprep.subr.bf16.mxu0 0
        %594 = vmatpush1.bf16.msra.mxu0 %v574
        %595 = vmatprep.subr.bf16.mxu0 0
        %596 = vmatpush1.bf16.msra.mxu0 %v573
        %597 = vmatprep.subr.bf16.mxu0 0
        %598 = vmatpush2.bf16.msra.mxu0 0
        %599 = vmatprep.subr.bf16.mxu0 0
        %600 = vmatpush2.bf16.msra.mxu0 0
        %601 = vmatprep.subr.bf16.mxu0 0
        %602 = vmatpush2.bf16.msra.mxu0 0
        %603 = vmatprep.subr.bf16.mxu0 0
        %604 = vmatpush2.bf16.msra.mxu0 0
        %605 = vmatprep.subr.bf16.mxu0 0
        %606 = vmatpush2.bf16.msra.mxu0 0
        %607 = vmatprep.subr.bf16.mxu0 0
        %608 = vmatpush2.bf16.msra.mxu0 0
        %609 = vmatprep.subr.bf16.mxu0 0
        %610 = vmatpush2.bf16.msra.mxu0 0
        %611 = vmatprep.subr.bf16.mxu0 0
        %612 = vmatpush2.bf16.msra.mxu0 0
        %613 = vmatprep.mubr.bf16.mxu0 0
        %614 = vmatmul.mubr.bf16.gmra.mxu0 %v579
        %v615 = vpop.f32.mrf.mxu0
        %v616 = vadd.f32 %v558, %v615
        %v617 = vpop.f32.mrf.mxu0
        %v618 = vpop.f32.mrf.mxu0
        %v619 = vpop.f32.mrf.mxu0
        %620 = vdwg.mxu0
        %v625 = vunpack.c.l.b16 %v547
        %v626 = vunpack.c.l.b16 %v548
        %v627 = vunpack.c.l.b16 %v549
        %v628 = vunpack.c.l.b16 %v550
        %v629 = vpack.c.b16 %v626, %v625
        %v630 = vpack.c.b16 %v628, %v627
        %633 = vmatprep.subr.bf16.mxu0 0
        %634 = vmatpush1.bf16.msra.mxu0 0
        %635 = vmatprep.subr.bf16.mxu0 0
        %636 = vmatpush1.bf16.msra.mxu0 0
        %637 = vmatprep.subr.bf16.mxu0 0
        %638 = vmatpush1.bf16.msra.mxu0 0
        %639 = vmatprep.subr.bf16.mxu0 0
        %640 = vmatpush1.bf16.msra.mxu0 0
        %641 = vmatprep.subr.bf16.mxu0 0
        %642 = vmatpush1.bf16.msra.mxu0 0
        %643 = vmatprep.subr.bf16.mxu0 0
        %644 = vmatpush1.bf16.msra.mxu0 0
        %645 = vmatprep.subr.bf16.mxu0 0
        %646 = vmatpush1.bf16.msra.mxu0 %v630
        %647 = vmatprep.subr.bf16.mxu0 0
        %648 = vmatpush1.bf16.msra.mxu0 %v629
        %649 = vmatprep.subr.bf16.mxu0 0
        %650 = vmatpush2.bf16.msra.mxu0 0
        %651 = vmatprep.subr.bf16.mxu0 0
        %652 = vmatpush2.bf16.msra.mxu0 0
        %653 = vmatprep.subr.bf16.mxu0 0
        %654 = vmatpush2.bf16.msra.mxu0 0
        %655 = vmatprep.subr.bf16.mxu0 0
        %656 = vmatpush2.bf16.msra.mxu0 0
        %657 = vmatprep.subr.bf16.mxu0 0
        %658 = vmatpush2.bf16.msra.mxu0 0
        %659 = vmatprep.subr.bf16.mxu0 0
        %660 = vmatpush2.bf16.msra.mxu0 0
        %661 = vmatprep.subr.bf16.mxu0 0
        %662 = vmatpush2.bf16.msra.mxu0 0
        %663 = vmatprep.subr.bf16.mxu0 0
        %664 = vmatpush2.bf16.msra.mxu0 0
        %665 = vmatprep.mubr.bf16.mxu0 0
        %666 = vmatmul.mubr.bf16.gmra.mxu0 %v579
        %v667 = vpop.f32.mrf.mxu0
        %v668 = vadd.f32 %v562, %v667
        %v669 = vpop.f32.mrf.mxu0
        %v670 = vpop.f32.mrf.mxu0
        %v671 = vpop.f32.mrf.mxu0
        %672 = vdwg.mxu0
        %v673 = vld [vmem:[%s6] sm:$0xf]
        %v674 = vld [vmem:[%s6 + $0x4] sm:$0xf]
        %v675 = vld [vmem:[%s6 + $0x8] sm:$0xf]
        %v676 = vld [vmem:[%s6 + $0xc] sm:$0xf]
        %v677 = vld [vmem:[%s6 + $0x10] sm:$0xf]
        %v678 = vld [vmem:[%s6 + $0x14] sm:$0xf]
        %v679 = vld [vmem:[%s6 + $0x18] sm:$0xf]
        %v680 = vld [vmem:[%s6 + $0x1c] sm:$0xf]
        %v681 = vld [vmem:[%s7] sm:$0x1]
        %v682 = vld [vmem:[%s7 + $0x1] sm:$0x1]
        %v685 = vlaneseq
        %v686 = vshrl.u32 %v685, 7
        %v687 = vsub.s32 0, %v686
        %v688 = vrot.slane %v681, %v687
        %v689 = vlaneseq
        %v690 = vshrl.u32 %v689, 7
        %v691 = vsub.s32 0, %v690
        %v692 = vrot.slane %v682, %v691
        %v699 = vunpack.c.l.b16 %v673
        %v700 = vunpack.c.l.b16 %v674
        %v701 = vunpack.c.l.b16 %v675
        %v702 = vunpack.c.l.b16 %v676
        %v703 = vpack.c.b16 %v700, %v699
        %v704 = vpack.c.b16 %v702, %v701
        %v708 = vsel %vm577, %v540, 0
        %710 = vmatprep.subr.bf16.mxu0 0
        %711 = vmatpush1.bf16.msra.mxu0 0
        %712 = vmatprep.subr.bf16.mxu0 0
        %713 = vmatpush1.bf16.msra.mxu0 0
        %714 = vmatprep.subr.bf16.mxu0 0
        %715 = vmatpush1.bf16.msra.mxu0 0
        %716 = vmatprep.subr.bf16.mxu0 0
        %717 = vmatpush1.bf16.msra.mxu0 0
        %718 = vmatprep.subr.bf16.mxu0 0
        %719 = vmatpush1.bf16.msra.mxu0 0
        %720 = vmatprep.subr.bf16.mxu0 0
        %721 = vmatpush1.bf16.msra.mxu0 0
        %722 = vmatprep.subr.bf16.mxu0 0
        %723 = vmatpush1.bf16.msra.mxu0 %v704
        %724 = vmatprep.subr.bf16.mxu0 0
        %725 = vmatpush1.bf16.msra.mxu0 %v703
        %726 = vmatprep.subr.bf16.mxu0 0
        %727 = vmatpush2.bf16.msra.mxu0 0
        %728 = vmatprep.subr.bf16.mxu0 0
        %729 = vmatpush2.bf16.msra.mxu0 0
        %730 = vmatprep.subr.bf16.mxu0 0
        %731 = vmatpush2.bf16.msra.mxu0 0
        %732 = vmatprep.subr.bf16.mxu0 0
        %733 = vmatpush2.bf16.msra.mxu0 0
        %734 = vmatprep.subr.bf16.mxu0 0
        %735 = vmatpush2.bf16.msra.mxu0 0
        %736 = vmatprep.subr.bf16.mxu0 0
        %737 = vmatpush2.bf16.msra.mxu0 0
        %738 = vmatprep.subr.bf16.mxu0 0
        %739 = vmatpush2.bf16.msra.mxu0 0
        %740 = vmatprep.subr.bf16.mxu0 0
        %741 = vmatpush2.bf16.msra.mxu0 0
        %742 = vmatprep.mubr.bf16.mxu0 0
        %743 = vmatmul.mubr.bf16.gmra.mxu0 %v708
        %v744 = vpop.f32.mrf.mxu0
        %v745 = vadd.f32 %v688, %v744
        %v746 = vpop.f32.mrf.mxu0
        %v747 = vpop.f32.mrf.mxu0
        %v748 = vpop.f32.mrf.mxu0
        %749 = vdwg.mxu0
        %v754 = vunpack.c.l.b16 %v677
        %v755 = vunpack.c.l.b16 %v678
        %v756 = vunpack.c.l.b16 %v679
        %v757 = vunpack.c.l.b16 %v680
        %v758 = vpack.c.b16 %v755, %v754
        %v759 = vpack.c.b16 %v757, %v756
        %762 = vmatprep.subr.bf16.mxu0 0
        %763 = vmatpush1.bf16.msra.mxu0 0
        %764 = vmatprep.subr.bf16.mxu0 0
        %765 = vmatpush1.bf16.msra.mxu0 0
        %766 = vmatprep.subr.bf16.mxu0 0
        %767 = vmatpush1.bf16.msra.mxu0 0
        %768 = vmatprep.subr.bf16.mxu0 0
        %769 = vmatpush1.bf16.msra.mxu0 0
        %770 = vmatprep.subr.bf16.mxu0 0
        %771 = vmatpush1.bf16.msra.mxu0 0
        %772 = vmatprep.subr.bf16.mxu0 0
        %773 = vmatpush1.bf16.msra.mxu0 0
        %774 = vmatprep.subr.bf16.mxu0 0
        %775 = vmatpush1.bf16.msra.mxu0 %v759
        %776 = vmatprep.subr.bf16.mxu0 0
        %777 = vmatpush1.bf16.msra.mxu0 %v758
        %778 = vmatprep.subr.bf16.mxu0 0
        %779 = vmatpush2.bf16.msra.mxu0 0
        %780 = vmatprep.subr.bf16.mxu0 0
        %781 = vmatpush2.bf16.msra.mxu0 0
        %782 = vmatprep.subr.bf16.mxu0 0
        %783 = vmatpush2.bf16.msra.mxu0 0
        %784 = vmatprep.subr.bf16.mxu0 0
        %785 = vmatpush2.bf16.msra.mxu0 0
        %786 = vmatprep.subr.bf16.mxu0 0
        %787 = vmatpush2.bf16.msra.mxu0 0
        %788 = vmatprep.subr.bf16.mxu0 0
        %789 = vmatpush2.bf16.msra.mxu0 0
        %790 = vmatprep.subr.bf16.mxu0 0
        %791 = vmatpush2.bf16.msra.mxu0 0
        %792 = vmatprep.subr.bf16.mxu0 0
        %793 = vmatpush2.bf16.msra.mxu0 0
        %794 = vmatprep.mubr.bf16.mxu0 0
        %795 = vmatmul.mubr.bf16.gmra.mxu0 %v708
        %v796 = vpop.f32.mrf.mxu0
        %v797 = vadd.f32 %v692, %v796
        %v798 = vpop.f32.mrf.mxu0
        %v799 = vpop.f32.mrf.mxu0
        %v800 = vpop.f32.mrf.mxu0
        %801 = vdwg.mxu0
        %v802 = vld [vmem:[%s8] sm:$0xf]
        %v803 = vld [vmem:[%s8 + $0x4] sm:$0xf]
        %v804 = vld [vmem:[%s8 + $0x8] sm:$0xf]
        %v805 = vld [vmem:[%s8 + $0xc] sm:$0xf]
        %v806 = vld [vmem:[%s8 + $0x10] sm:$0xf]
        %v807 = vld [vmem:[%s8 + $0x14] sm:$0xf]
        %v808 = vld [vmem:[%s8 + $0x18] sm:$0xf]
        %v809 = vld [vmem:[%s8 + $0x1c] sm:$0xf]
        %v810 = vld [vmem:[%s9] sm:$0x1]
        %v811 = vld [vmem:[%s9 + $0x1] sm:$0x1]
        %v814 = vlaneseq
        %v815 = vshrl.u32 %v814, 7
        %v816 = vsub.s32 0, %v815
        %v817 = vrot.slane %v810, %v816
        %v818 = vlaneseq
        %v819 = vshrl.u32 %v818, 7
        %v820 = vsub.s32 0, %v819
        %v821 = vrot.slane %v811, %v820
        %v828 = vunpack.c.l.b16 %v802
        %v829 = vunpack.c.l.b16 %v803
        %v830 = vunpack.c.l.b16 %v804
        %v831 = vunpack.c.l.b16 %v805
        %v832 = vpack.c.b16 %v829, %v828
        %v833 = vpack.c.b16 %v831, %v830
        %v837 = vsel %vm577, %v542, 0
        %839 = vmatprep.subr.bf16.mxu0 0
        %840 = vmatpush1.bf16.msra.mxu0 0
        %841 = vmatprep.subr.bf16.mxu0 0
        %842 = vmatpush1.bf16.msra.mxu0 0
        %843 = vmatprep.subr.bf16.mxu0 0
        %844 = vmatpush1.bf16.msra.mxu0 0
        %845 = vmatprep.subr.bf16.mxu0 0
        %846 = vmatpush1.bf16.msra.mxu0 0
        %847 = vmatprep.subr.bf16.mxu0 0
        %848 = vmatpush1.bf16.msra.mxu0 0
        %849 = vmatprep.subr.bf16.mxu0 0
        %850 = vmatpush1.bf16.msra.mxu0 0
        %851 = vmatprep.subr.bf16.mxu0 0
        %852 = vmatpush1.bf16.msra.mxu0 %v833
        %853 = vmatprep.subr.bf16.mxu0 0
        %854 = vmatpush1.bf16.msra.mxu0 %v832
        %855 = vmatprep.subr.bf16.mxu0 0
        %856 = vmatpush2.bf16.msra.mxu0 0
        %857 = vmatprep.subr.bf16.mxu0 0
        %858 = vmatpush2.bf16.msra.mxu0 0
        %859 = vmatprep.subr.bf16.mxu0 0
        %860 = vmatpush2.bf16.msra.mxu0 0
        %861 = vmatprep.subr.bf16.mxu0 0
        %862 = vmatpush2.bf16.msra.mxu0 0
        %863 = vmatprep.subr.bf16.mxu0 0
        %864 = vmatpush2.bf16.msra.mxu0 0
        %865 = vmatprep.subr.bf16.mxu0 0
        %866 = vmatpush2.bf16.msra.mxu0 0
        %867 = vmatprep.subr.bf16.mxu0 0
        %868 = vmatpush2.bf16.msra.mxu0 0
        %869 = vmatprep.subr.bf16.mxu0 0
        %870 = vmatpush2.bf16.msra.mxu0 0
        %871 = vmatprep.mubr.bf16.mxu0 0
        %872 = vmatmul.mubr.bf16.gmra.mxu0 %v837
        %v873 = vpop.f32.mrf.mxu0
        %v874 = vadd.f32 %v817, %v873
        %v875 = vpop.f32.mrf.mxu0
        %v876 = vpop.f32.mrf.mxu0
        %v877 = vpop.f32.mrf.mxu0
        %878 = vdwg.mxu0
        %v883 = vunpack.c.l.b16 %v806
        %v884 = vunpack.c.l.b16 %v807
        %v885 = vunpack.c.l.b16 %v808
        %v886 = vunpack.c.l.b16 %v809
        %v887 = vpack.c.b16 %v884, %v883
        %v888 = vpack.c.b16 %v886, %v885
        %891 = vmatprep.subr.bf16.mxu0 0
        %892 = vmatpush1.bf16.msra.mxu0 0
        %893 = vmatprep.subr.bf16.mxu0 0
        %894 = vmatpush1.bf16.msra.mxu0 0
        %895 = vmatprep.subr.bf16.mxu0 0
        %896 = vmatpush1.bf16.msra.mxu0 0
        %897 = vmatprep.subr.bf16.mxu0 0
        %898 = vmatpush1.bf16.msra.mxu0 0
        %899 = vmatprep.subr.bf16.mxu0 0
        %900 = vmatpush1.bf16.msra.mxu0 0
        %901 = vmatprep.subr.bf16.mxu0 0
        %902 = vmatpush1.bf16.msra.mxu0 0
        %903 = vmatprep.subr.bf16.mxu0 0
        %904 = vmatpush1.bf16.msra.mxu0 %v888
        %905 = vmatprep.subr.bf16.mxu0 0
        %906 = vmatpush1.bf16.msra.mxu0 %v887
        %907 = vmatprep.subr.bf16.mxu0 0
        %908 = vmatpush2.bf16.msra.mxu0 0
        %909 = vmatprep.subr.bf16.mxu0 0
        %910 = vmatpush2.bf16.msra.mxu0 0
        %911 = vmatprep.subr.bf16.mxu0 0
        %912 = vmatpush2.bf16.msra.mxu0 0
        %913 = vmatprep.subr.bf16.mxu0 0
        %914 = vmatpush2.bf16.msra.mxu0 0
        %915 = vmatprep.subr.bf16.mxu0 0
        %916 = vmatpush2.bf16.msra.mxu0 0
        %917 = vmatprep.subr.bf16.mxu0 0
        %918 = vmatpush2.bf16.msra.mxu0 0
        %919 = vmatprep.subr.bf16.mxu0 0
        %920 = vmatpush2.bf16.msra.mxu0 0
        %921 = vmatprep.subr.bf16.mxu0 0
        %922 = vmatpush2.bf16.msra.mxu0 0
        %923 = vmatprep.mubr.bf16.mxu0 0
        %924 = vmatmul.mubr.bf16.gmra.mxu0 %v837
        %v925 = vpop.f32.mrf.mxu0
        %v926 = vadd.f32 %v821, %v925
        %v927 = vpop.f32.mrf.mxu0
        %v928 = vpop.f32.mrf.mxu0
        %v929 = vpop.f32.mrf.mxu0
        %930 = vdwg.mxu0
        %v931 = vld [vmem:[%s535] sm:$0xff]
        %vm932 = vcmp.eq.s32.totalorder %v931, 0
        %v933 = vsel %vm932, -1e+09, 0.0
        %v934 = vpack.c.bf16 %v616, %v616
        %v935 = vpack.c.bf16 %v668, %v668
        %v936 = vpack.c.bf16 %v745, %v745
        %v937 = vpack.c.bf16 %v797, %v797
        %vm938 = vcmask 130048
        %v940 = vsel %vm938, %v934, 0
        %v943 = vsel %vm938, %v936, 0
        %945 = vmatprep.subr.bf16.mxu0 0
        %946 = vmatpush1.bf16.xpose.msra.mxu0 0
        %947 = vmatprep.subr.bf16.mxu0 0
        %948 = vmatpush1.bf16.xpose.msra.mxu0 0
        %949 = vmatprep.subr.bf16.mxu0 0
        %950 = vmatpush1.bf16.xpose.msra.mxu0 0
        %951 = vmatprep.subr.bf16.mxu0 0
        %952 = vmatpush1.bf16.xpose.msra.mxu0 0
        %953 = vmatprep.subr.bf16.mxu0 0
        %954 = vmatpush1.bf16.xpose.msra.mxu0 0
        %955 = vmatprep.subr.bf16.mxu0 0
        %956 = vmatpush1.bf16.xpose.msra.mxu0 0
        %957 = vmatprep.subr.bf16.mxu0 0
        %958 = vmatpush1.bf16.xpose.msra.mxu0 0
        %959 = vmatprep.subr.bf16.mxu0 0
        %960 = vmatpush1.bf16.xpose.msra.mxu0 %v943
        %961 = vmatprep.subr.bf16.mxu0 0
        %962 = vmatpush2.bf16.xpose.msra.mxu0 0
        %963 = vmatprep.subr.bf16.mxu0 0
        %964 = vmatpush2.bf16.xpose.msra.mxu0 0
        %965 = vmatprep.subr.bf16.mxu0 0
        %966 = vmatpush2.bf16.xpose.msra.mxu0 0
        %967 = vmatprep.subr.bf16.mxu0 0
        %968 = vmatpush2.bf16.xpose.msra.mxu0 0
        %969 = vmatprep.subr.bf16.mxu0 0
        %970 = vmatpush2.bf16.xpose.msra.mxu0 0
        %971 = vmatprep.subr.bf16.mxu0 0
        %972 = vmatpush2.bf16.xpose.msra.mxu0 0
        %973 = vmatprep.subr.bf16.mxu0 0
        %974 = vmatpush2.bf16.xpose.msra.mxu0 0
        %975 = vmatprep.subr.bf16.mxu0 0
        %976 = vmatpush2.bf16.xpose.msra.mxu0 0
        %977 = vmatprep.mubr.bf16.mxu0 0
        %978 = vmatmul.mubr.bf16.gmra.mxu0 %v940
        %v979 = vpop.f32.mrf.mxu0
        %v980 = vadd.f32 0.0, %v979
        %v981 = vpop.f32.mrf.mxu0
        %v982 = vpop.f32.mrf.mxu0
        %v983 = vpop.f32.mrf.mxu0
        %984 = vdwg.mxu0
        %v986 = vsel %vm938, %v935, 0
        %v989 = vsel %vm938, %v937, 0
        %991 = vmatprep.subr.bf16.mxu0 0
        %992 = vmatpush1.bf16.xpose.msra.mxu0 0
        %993 = vmatprep.subr.bf16.mxu0 0
        %994 = vmatpush1.bf16.xpose.msra.mxu0 0
        %995 = vmatprep.subr.bf16.mxu0 0
        %996 = vmatpush1.bf16.xpose.msra.mxu0 0
        %997 = vmatprep.subr.bf16.mxu0 0
        %998 = vmatpush1.bf16.xpose.msra.mxu0 0
        %999 = vmatprep.subr.bf16.mxu0 0
        %1000 = vmatpush1.bf16.xpose.msra.mxu0 0
        %1001 = vmatprep.subr.bf16.mxu0 0
        %1002 = vmatpush1.bf16.xpose.msra.mxu0 0
        %1003 = vmatprep.subr.bf16.mxu0 0
        %1004 = vmatpush1.bf16.xpose.msra.mxu0 0
        %1005 = vmatprep.subr.bf16.mxu0 0
        %1006 = vmatpush1.bf16.xpose.msra.mxu0 %v989
        %1007 = vmatprep.subr.bf16.mxu0 0
        %1008 = vmatpush2.bf16.xpose.msra.mxu0 0
        %1009 = vmatprep.subr.bf16.mxu0 0
        %1010 = vmatpush2.bf16.xpose.msra.mxu0 0
        %1011 = vmatprep.subr.bf16.mxu0 0
        %1012 = vmatpush2.bf16.xpose.msra.mxu0 0
        %1013 = vmatprep.subr.bf16.mxu0 0
        %1014 = vmatpush2.bf16.xpose.msra.mxu0 0
        %1015 = vmatprep.subr.bf16.mxu0 0
        %1016 = vmatpush2.bf16.xpose.msra.mxu0 0
        %1017 = vmatprep.subr.bf16.mxu0 0
        %1018 = vmatpush2.bf16.xpose.msra.mxu0 0
        %1019 = vmatprep.subr.bf16.mxu0 0
        %1020 = vmatpush2.bf16.xpose.msra.mxu0 0
        %1021 = vmatprep.subr.bf16.mxu0 0
        %1022 = vmatpush2.bf16.xpose.msra.mxu0 0
        %1023 = vmatprep.mubr.bf16.mxu0 0
        %1024 = vmatmul.mubr.bf16.gmra.mxu0 %v986
        %v1025 = vpop.f32.mrf.mxu0
        %v1026 = vadd.f32 0.0, %v1025
        %v1027 = vpop.f32.mrf.mxu0
        %v1028 = vpop.f32.mrf.mxu0
        %v1029 = vpop.f32.mrf.mxu0
        %1030 = vdwg.mxu0
        %v1031 = vmul.f32 %v980, 0.25
        %v1032 = vmul.f32 %v1026, 0.25
        %v1033 = vadd.f32 %v1031, %v933
        %v1034 = vadd.f32 %v1032, %v933
        %vm1035 = vcmask 64512
        %v1036 = vsel %vm1035, %v1033, -inf
        %1037 = vmax.xlane.f32.xlu0 %v1036
        %v1038 = vpop.xlane.xlu0 %1037
        %v1039 = vsel %vm1035, %v1034, -inf
        %1040 = vmax.xlane.f32.xlu0 %v1039
        %v1041 = vpop.xlane.xlu0 %1040
        %v1042 = vsub.f32 %v1033, %v1038
        %v1043 = vsub.f32 %v1034, %v1041
        %v1044 = vmul.f32 %v1042, 1.442695
        %v1045 = vpow.pop %v1044
        %v1046 = vmul.f32 %v1043, 1.442695
        %v1047 = vpow.pop %v1046
        %v1048 = vsel %vm1035, %v1045, 0.0
        %1049 = vadd.xlane.f32.xlu0 %v1048
        %v1050 = vpop.xlane.xlu0 %1049
        %v1051 = vsel %vm1035, %v1047, 0.0
        %1052 = vadd.xlane.f32.xlu0 %v1051
        %v1053 = vpop.xlane.xlu0 %1052
        %v1054 = vrcp.pop %v1050
        %v1055 = vrcp.pop %v1053
        %v1056 = vmul.f32 %v1045, %v1054
        %v1057 = vmul.f32 %v1047, %v1055
        %v1058 = vpack.c.bf16 %v1056, %v1056
        %v1059 = vpack.c.bf16 %v1057, %v1057
        %v1060 = vpack.c.bf16 %v874, %v874
        %v1061 = vpack.c.bf16 %v926, %v926
        %v1063 = vsel %vm1035, %v1058, 0
        %vm1065 = vcmask 1043456
        %v1067 = vsel %vm1065, %v1060, 0
        %1069 = vmatprep.subr.bf16.mxu0 0
        %1070 = vmatpush1.bf16.msra.mxu0 0
        %1071 = vmatprep.subr.bf16.mxu0 0
        %1072 = vmatpush1.bf16.msra.mxu0 0
        %1073 = vmatprep.subr.bf16.mxu0 0
        %1074 = vmatpush1.bf16.msra.mxu0 0
        %1075 = vmatprep.subr.bf16.mxu0 0
        %1076 = vmatpush1.bf16.msra.mxu0 0
        %1077 = vmatprep.subr.bf16.mxu0 0
        %1078 = vmatpush1.bf16.msra.mxu0 0
        %1079 = vmatprep.subr.bf16.mxu0 0
        %1080 = vmatpush1.bf16.msra.mxu0 0
        %1081 = vmatprep.subr.bf16.mxu0 0
        %1082 = vmatpush1.bf16.msra.mxu0 0
        %1083 = vmatprep.subr.bf16.mxu0 0
        %1084 = vmatpush1.bf16.msra.mxu0 %v1067
        %1085 = vmatprep.subr.bf16.mxu0 0
        %1086 = vmatpush2.bf16.msra.mxu0 0
        %1087 = vmatprep.subr.bf16.mxu0 0
        %1088 = vmatpush2.bf16.msra.mxu0 0
        %1089 = vmatprep.subr.bf16.mxu0 0
        %1090 = vmatpush2.bf16.msra.mxu0 0
        %1091 = vmatprep.subr.bf16.mxu0 0
        %1092 = vmatpush2.bf16.msra.mxu0 0
        %1093 = vmatprep.subr.bf16.mxu0 0
        %1094 = vmatpush2.bf16.msra.mxu0 0
        %1095 = vmatprep.subr.bf16.mxu0 0
        %1096 = vmatpush2.bf16.msra.mxu0 0
        %1097 = vmatprep.subr.bf16.mxu0 0
        %1098 = vmatpush2.bf16.msra.mxu0 0
        %1099 = vmatprep.subr.bf16.mxu0 0
        %1100 = vmatpush2.bf16.msra.mxu0 0
        %1101 = vmatprep.mubr.bf16.mxu0 0
        %1102 = vmatmul.mubr.bf16.gmra.mxu0 %v1063
        %v1103 = vpop.f32.mrf.mxu0
        %v1104 = vadd.f32 0.0, %v1103
        %v1105 = vpop.f32.mrf.mxu0
        %v1106 = vpop.f32.mrf.mxu0
        %v1107 = vpop.f32.mrf.mxu0
        %1108 = vdwg.mxu0
        %v1110 = vsel %vm1035, %v1059, 0
        %v1113 = vsel %vm1065, %v1061, 0
        %1115 = vmatprep.subr.bf16.mxu0 0
        %1116 = vmatpush1.bf16.msra.mxu0 0
        %1117 = vmatprep.subr.bf16.mxu0 0
        %1118 = vmatpush1.bf16.msra.mxu0 0
        %1119 = vmatprep.subr.bf16.mxu0 0
        %1120 = vmatpush1.bf16.msra.mxu0 0
        %1121 = vmatprep.subr.bf16.mxu0 0
        %1122 = vmatpush1.bf16.msra.mxu0 0
        %1123 = vmatprep.subr.bf16.mxu0 0
        %1124 = vmatpush1.bf16.msra.mxu0 0
        %1125 = vmatprep.subr.bf16.mxu0 0
        %1126 = vmatpush1.bf16.msra.mxu0 0
        %1127 = vmatprep.subr.bf16.mxu0 0
        %1128 = vmatpush1.bf16.msra.mxu0 0
        %1129 = vmatprep.subr.bf16.mxu0 0
        %1130 = vmatpush1.bf16.msra.mxu0 %v1113
        %1131 = vmatprep.subr.bf16.mxu0 0
        %1132 = vmatpush2.bf16.msra.mxu0 0
        %1133 = vmatprep.subr.bf16.mxu0 0
        %1134 = vmatpush2.bf16.msra.mxu0 0
        %1135 = vmatprep.subr.bf16.mxu0 0
        %1136 = vmatpush2.bf16.msra.mxu0 0
        %1137 = vmatprep.subr.bf16.mxu0 0
        %1138 = vmatpush2.bf16.msra.mxu0 0
        %1139 = vmatprep.subr.bf16.mxu0 0
        %1140 = vmatpush2.bf16.msra.mxu0 0
        %1141 = vmatprep.subr.bf16.mxu0 0
        %1142 = vmatpush2.bf16.msra.mxu0 0
        %1143 = vmatprep.subr.bf16.mxu0 0
        %1144 = vmatpush2.bf16.msra.mxu0 0
        %1145 = vmatprep.subr.bf16.mxu0 0
        %1146 = vmatpush2.bf16.msra.mxu0 0
        %1147 = vmatprep.mubr.bf16.mxu0 0
        %1148 = vmatmul.mubr.bf16.gmra.mxu0 %v1110
        %v1149 = vpop.f32.mrf.mxu0
        %v1150 = vadd.f32 0.0, %v1149
        %v1151 = vpop.f32.mrf.mxu0
        %v1152 = vpop.f32.mrf.mxu0
        %v1153 = vpop.f32.mrf.mxu0
        %1154 = vdwg.mxu0
        %v1155 = vpack.c.bf16 %v1104, %v1104
        %v1156 = vpack.c.bf16 %v1150, %v1150
        %v1157 = vld [vmem:[%s10] sm:$0xf]
        %v1158 = vld [vmem:[%s10 + $0x4] sm:$0xf]
        %v1159 = vld [vmem:[%s10 + $0x8] sm:$0xf]
        %v1160 = vld [vmem:[%s10 + $0xc] sm:$0xf]
        %v1163 = vunpack.c.l.b16 %v1157
        %v1164 = vunpack.c.l.b16 %v1158
        %v1165 = vpack.c.b16 %v1164, %v1163
        %v1168 = vsel %vm938, %v1155, 0
        %1170 = vmatprep.subr.bf16.mxu0 0
        %1171 = vmatpush1.bf16.msra.mxu0 0
        %1172 = vmatprep.subr.bf16.mxu0 0
        %1173 = vmatpush1.bf16.msra.mxu0 0
        %1174 = vmatprep.subr.bf16.mxu0 0
        %1175 = vmatpush1.bf16.msra.mxu0 0
        %1176 = vmatprep.subr.bf16.mxu0 0
        %1177 = vmatpush1.bf16.msra.mxu0 0
        %1178 = vmatprep.subr.bf16.mxu0 0
        %1179 = vmatpush1.bf16.msra.mxu0 0
        %1180 = vmatprep.subr.bf16.mxu0 0
        %1181 = vmatpush1.bf16.msra.mxu0 0
        %1182 = vmatprep.subr.bf16.mxu0 0
        %1183 = vmatpush1.bf16.msra.mxu0 0
        %1184 = vmatprep.subr.bf16.mxu0 0
        %1185 = vmatpush1.bf16.msra.mxu0 %v1165
        %1186 = vmatprep.subr.bf16.mxu0 0
        %1187 = vmatpush2.bf16.msra.mxu0 0
        %1188 = vmatprep.subr.bf16.mxu0 0
        %1189 = vmatpush2.bf16.msra.mxu0 0
        %1190 = vmatprep.subr.bf16.mxu0 0
        %1191 = vmatpush2.bf16.msra.mxu0 0
        %1192 = vmatprep.subr.bf16.mxu0 0
        %1193 = vmatpush2.bf16.msra.mxu0 0
        %1194 = vmatprep.subr.bf16.mxu0 0
        %1195 = vmatpush2.bf16.msra.mxu0 0
        %1196 = vmatprep.subr.bf16.mxu0 0
        %1197 = vmatpush2.bf16.msra.mxu0 0
        %1198 = vmatprep.subr.bf16.mxu0 0
        %1199 = vmatpush2.bf16.msra.mxu0 0
        %1200 = vmatprep.subr.bf16.mxu0 0
        %1201 = vmatpush2.bf16.msra.mxu0 0
        %1202 = vmatprep.mubr.bf16.mxu0 0
        %1203 = vmatmul.mubr.bf16.gmra.mxu0 %v1168
        %v1204 = vpop.f32.mrf.mxu0
        %v1205 = vadd.f32 0.0, %v1204
        %v1206 = vpop.f32.mrf.mxu0
        %v1207 = vpop.f32.mrf.mxu0
        %v1208 = vpop.f32.mrf.mxu0
        %1209 = vdwg.mxu0
        %v1212 = vunpack.c.l.b16 %v1159
        %v1213 = vunpack.c.l.b16 %v1160
        %v1214 = vpack.c.b16 %v1213, %v1212
        %v1217 = vsel %vm938, %v1156, 0
        %1219 = vmatprep.subr.bf16.mxu0 0
        %1220 = vmatpush1.bf16.msra.mxu0 0
        %1221 = vmatprep.subr.bf16.mxu0 0
        %1222 = vmatpush1.bf16.msra.mxu0 0
        %1223 = vmatprep.subr.bf16.mxu0 0
        %1224 = vmatpush1.bf16.msra.mxu0 0
        %1225 = vmatprep.subr.bf16.mxu0 0
        %1226 = vmatpush1.bf16.msra.mxu0 0
        %1227 = vmatprep.subr.bf16.mxu0 0
        %1228 = vmatpush1.bf16.msra.mxu0 0
        %1229 = vmatprep.subr.bf16.mxu0 0
        %1230 = vmatpush1.bf16.msra.mxu0 0
        %1231 = vmatprep.subr.bf16.mxu0 0
        %1232 = vmatpush1.bf16.msra.mxu0 0
        %1233 = vmatprep.subr.bf16.mxu0 0
        %1234 = vmatpush1.bf16.msra.mxu0 %v1214
        %1235 = vmatprep.subr.bf16.mxu0 0
        %1236 = vmatpush2.bf16.msra.mxu0 0
        %1237 = vmatprep.subr.bf16.mxu0 0
        %1238 = vmatpush2.bf16.msra.mxu0 0
        %1239 = vmatprep.subr.bf16.mxu0 0
        %1240 = vmatpush2.bf16.msra.mxu0 0
        %1241 = vmatprep.subr.bf16.mxu0 0
        %1242 = vmatpush2.bf16.msra.mxu0 0
        %1243 = vmatprep.subr.bf16.mxu0 0
        %1244 = vmatpush2.bf16.msra.mxu0 0
        %1245 = vmatprep.subr.bf16.mxu0 0
        %1246 = vmatpush2.bf16.msra.mxu0 0
        %1247 = vmatprep.subr.bf16.mxu0 0
        %1248 = vmatpush2.bf16.msra.mxu0 0
        %1249 = vmatprep.subr.bf16.mxu0 0
        %1250 = vmatpush2.bf16.msra.mxu0 0
        %1251 = vmatprep.mubr.bf16.mxu0 0
        %1252 = vmatmul.mubr.bf16.gmra.mxu0 %v1217
        %v1253 = vpop.f32.mrf.mxu0
        %v1254 = vadd.f32 0.0, %v1253
        %v1255 = vpop.f32.mrf.mxu0
        %v1256 = vpop.f32.mrf.mxu0
        %v1257 = vpop.f32.mrf.mxu0
        %1258 = vdwg.mxu0
        %v1259 = vsel %vm577, %v1205, 0.0
        %v1260 = vsel %vm577, %v1254, 0.0
        %v1261 = vadd.f32 %v1259, %v1260
        %v1262 = vld [vmem:[%s11] sm:$0x1]
        %v1264 = vlaneseq
        %v1265 = vshrl.u32 %v1264, 7
        %v1266 = vsub.s32 0, %v1265
        %v1267 = vrot.slane %v1262, %v1266
        %v1269 = vadd.f32 %v1261, %v1267
        %1270 = vst.msk [vmem:[%s506] sm:$0xff] %vm577, %v1269
        %1271 = vst.msk [vmem:[%s513] sm:$0xff] %vm938, %v1104
        %1272 = vst.msk [vmem:[%s513 + $0x8] sm:$0xff] %vm938, %v1150
        %s1273 = sand.u32 %s329, 1
        %s1274 = scalar_lea.sflag [#allocation3], %s1273
        %s1275 = sand.u32 %s329, 1
        %s1276 = smul.addr %s1275, 8
        %s1277 = scalar_lea.vmem [#allocation2], %s1276
        %s1278 = sand.u32 %s357, 1
        %s1279 = scalar_lea.sflag [#allocation5], %s1278
        %s1280 = sand.u32 %s357, 1
        %s1281 = smul.addr %s1280, 16
        %s1282 = scalar_lea.vmem [#allocation4], %s1281
        // Predicated region
        $region69: #{tpu_custom_call.1} parent=67 // pred_check
          %p1283 = pneg %p339
        $region70: #{tpu_custom_call.1} parent=67 // pred_check_branch
          %1285 = sbr.rel (%p1283) target = $region72
        $region71: #{tpu_custom_call.1} parent=67 // pred_region
          %s1287 = ssub.s32 128, 128
          %1288 = vsyncadd %s1274, %s1287
          %s1289 = sadd.s32 %s36, %s35
          %s1290 = smul.addr %s1289, 128
          %s1291 = scalar_lea.hbm %s12, %s1290
          %s1293 = sshll.u32 %s1277, 4
          %s1294 = int_to_ptr.vmem [resolvable:$true] %s1293
          %1296 = dma.vmem_to_hbm [thread:$0]  %s1294, 128, %s1291, %s1274
        $region72: #{tpu_custom_call.1} parent=67 // pred_fallthru
          _
        // Predicated region
        $region73: #{tpu_custom_call.1} parent=67 // pred_check
          %p1297 = pneg %p367
        $region74: #{tpu_custom_call.1} parent=67 // pred_check_branch
          %1299 = sbr.rel (%p1297) target = $region76
        $region75: #{tpu_custom_call.1} parent=67 // pred_region
          %s1301 = ssub.s32 256, 256
          %1302 = vsyncadd %s1279, %s1301
          %s1303 = smul.addr %s35, 2
          %s1304 = sadd.s32 %s36, %s1303
          %s1305 = smul.addr %s1304, 128
          %s1306 = scalar_lea.hbm %s13, %s1305
          %s1307 = sshll.u32 %s1282, 4
          %s1308 = int_to_ptr.vmem [resolvable:$true] %s1307
          %1313 = dma.vmem_to_hbm [thread:$0]  %s1308, 256, %s1306, %s1279, 128, 128, 8
        $region76: #{tpu_custom_call.1} parent=67 // pred_fallthru
          _
      $region68: #{tpu_custom_call.1} parent=5 // pred_fallthru
        _
      %p1314 = scmp.le.s32.totalorder 2, %s26
      // Predicated region
      $region77: #{tpu_custom_call.1} parent=5 // pred_check
        %p1315 = pneg %p1314
      $region78: #{tpu_custom_call.1} parent=5 // pred_check_branch
        %1317 = sbr.rel (%p1315) target = $region80
      $region79: #{tpu_custom_call.1} parent=5 // pred_region
        %s1318 = ssub.s32 %s26, 2
        // Predicated region
        $region81: #{tpu_custom_call.1} parent=79 // pred_check
          %p1319 = pneg %p345
        $region82: #{tpu_custom_call.1} parent=79 // pred_check_branch
          %1321 = sbr.rel (%p1319) target = $region84
        $region83: #{tpu_custom_call.1} parent=79 // pred_region
          %s1322 = sand.u32 %s330, 1
          %s1323 = scalar_lea.sflag [#allocation3], %s1322
          %s1324 = sand.u32 %s330, 1
          %s1325 = smul.addr %s1324, 8
          %s1326 = scalar_lea.vmem [#allocation2], %s1325
          %1327 = dma.done %s1323, 128
        $region84: #{tpu_custom_call.1} parent=79 // pred_fallthru
          _
        // Predicated region
        $region85: #{tpu_custom_call.1} parent=79 // pred_check
          %p1328 = pneg %p373
        $region86: #{tpu_custom_call.1} parent=79 // pred_check_branch
          %1330 = sbr.rel (%p1328) target = $region88
        $region87: #{tpu_custom_call.1} parent=79 // pred_region
          %s1331 = sand.u32 %s358, 1
          %s1332 = scalar_lea.sflag [#allocation5], %s1331
          %s1333 = sand.u32 %s358, 1
          %s1334 = smul.addr %s1333, 16
          %s1335 = scalar_lea.vmem [#allocation4], %s1334
          %1336 = dma.done %s1332, 256
        $region88: #{tpu_custom_call.1} parent=79 // pred_fallthru
          _
      $region80: #{tpu_custom_call.1} parent=5 // pred_fallthru
        _
    $region6: #{tpu_custom_call.1} parent=1 // loop_footer
      %s30 = sadd.s32 1, %s26
    $region7: #{tpu_custom_call.1} parent=1 // loop_footer_branch
      %25 = sbr.rel target = $region3
    $region8: #{tpu_custom_call.1} parent=1 // loop_exit
      _
    %1337 = vsyncpa [#allocation3], 1
    %s1338 = scalar_lea.sflag [#allocation3], 1
    %1339 = vsyncpa %s1338, 1
    %1340 = vsyncpa [#allocation5], 1
    %s1341 = scalar_lea.sflag [#allocation5], 1
    %1342 = vsyncpa %s1341, 1

</llo_original>
